<compile_context>
chip_gen: v6e
topology: v6e:2x2x1
jax: 0.10.0
libtpu: 0.0.40
codegen_flags: <defaults>
</compile_context>

<pallas_src>
import jax
import jax.numpy as jnp
from jax.experimental import pallas as pl
from jax.experimental.pallas import tpu as pltpu


def _round_up(x, m):
    return (x + m - 1) // m * m


# ---------------------------------------------------------------------------
# Pallas splat kernel: grid = (B, N, HW//TILE_HW, G//TILE_G)
# scalar-prefetch arg 0: flat int32 activity mask [B*N*P*K]
# ---------------------------------------------------------------------------
def _splat_kernel(mask_ref, gprm_ref, rhs_ref, pix_ref, sky_ref, out_ref, acc_ref):
    b = pl.program_id(0)
    n = pl.program_id(1)
    p = pl.program_id(2)
    k = pl.program_id(3)
    nN = pl.num_programs(1)
    nP = pl.num_programs(2)
    nK = pl.num_programs(3)

    @pl.when(k == 0)
    def _init():
        acc_ref[...] = jnp.zeros_like(acc_ref)

    chunk_active = mask_ref[((b * nN + n) * nP + p) * nK + k] != 0

    @pl.when(chunk_active)
    def _accumulate():
        g = gprm_ref[0, 0]                        # (TILE_G, 8) f32
        u = g[:, 0:1]                             # (TILE_G, 1)
        v = g[:, 1:2]
        neg_inv2s2 = g[:, 2:3]                    # -1/(2 sigma^2); 0 for invalid
        bias = g[:, 3:4]                          # log(opacity); -1e4 for invalid
        x = pix_ref[0:1, :]                       # (1, TILE_HW)
        y = pix_ref[1:2, :]
        # Differenced quadratic (no catastrophic cancellation), pure VPU work.
        du = x - u                                # (TILE_G, TILE_HW)
        dv = y - v
        expo = (du * du + dv * dv) * neg_inv2s2 + bias
        # bf16 EUP exp (v6e/v7x fast path; v5e upconverts); opacity folded in,
        # padded / invalid gaussians have exp(-1e4) == 0.
        w = jnp.exp(expo.astype(jnp.bfloat16))    # (TILE_G, TILE_HW) bf16
        # One fused MXU reduction: rgb, depth and weight-sum in a single matmul,
        # bf16 inputs, f32 accumulation, lane-dense (8, TILE_HW) result.
        acc_ref[...] += jnp.dot(rhs_ref[0, 0], w,
                                preferred_element_type=jnp.float32)

    @pl.when(k == nK - 1)
    def _finalize():
        acc = acc_ref[...]                        # (8, TILE_HW) f32
        csum = acc[0:3, :]
        dsum = acc[3:4, :]
        wsum = acc[4:5, :]
        alpha = 1.0 - jnp.exp(-wsum)              # order-independent compositing
        inv_w = pl.reciprocal(jnp.maximum(wsum, 1e-8), approx=True)
        img_fg = csum * (inv_w * alpha)
        depth = dsum * inv_w
        sky = sky_ref[0, 0]                       # (3, TILE_HW)
        img = img_fg + (1.0 - alpha) * sky        # fused sky compositing
        # single lane-dense full-tile store
        out_ref[0, 0] = jnp.concatenate([img, img_fg, depth, alpha], axis=0)


# ---------------------------------------------------------------------------
# Plain-JAX glue: per-camera gaussian projection -> packed operands.
# ---------------------------------------------------------------------------
def _project_gaussians(gaussians, viewmats, intrinsics):
    """gaussians [B,Gp,14] (padded), viewmats [B,N,4,4], intrinsics [B,N,6].
    Returns gprm [B,N,Gp,8] f32, rhs [B,N,8,Gp] bf16, (u, v, radius, ok)."""
    xyz = gaussians[..., 0:3]
    scales = gaussians[..., 3:6]
    opac = jnp.clip(gaussians[..., 10], 0.0, 1.0)
    rgb = gaussians[..., 11:14]

    R = viewmats[:, :, :3, :3].astype(jnp.float32)             # [B,N,3,3]
    t = viewmats[:, :, :3, 3].astype(jnp.float32)              # [B,N,3]
    cam = jnp.einsum("bnij,bgj->bngi", R, xyz) + t[:, :, None, :]
    px, py, pz = cam[..., 0], cam[..., 1], cam[..., 2]         # [B,N,G]

    fx = intrinsics[:, :, 0:1].astype(jnp.float32)
    fy = intrinsics[:, :, 1:2].astype(jnp.float32)
    cx = intrinsics[:, :, 2:3].astype(jnp.float32)
    cy = intrinsics[:, :, 3:4].astype(jnp.float32)

    valid = pz > 1e-3
    dsafe = jnp.maximum(pz, 1e-3)
    inv_d = 1.0 / dsafe
    u = fx * px * inv_d + cx
    v = fy * py * inv_d + cy
    # TODO(synk): isotropic screen-space footprint; quaternion/scale anisotropy dropped.
    mean_scale = jnp.mean(scales, axis=-1)[:, None, :]          # [B,1,G]
    sigma = jnp.maximum(fx * mean_scale * inv_d, 0.3)
    inv2s2 = 0.5 / (sigma * sigma)

    opac_bn = jnp.broadcast_to(opac[:, None, :], pz.shape)
    ok = valid & (opac_bn > 0.0)
    z = jnp.zeros_like(pz)
    gprm = jnp.stack([
        jnp.where(ok, u, 0.0),
        jnp.where(ok, v, 0.0),
        jnp.where(ok, -inv2s2, 0.0),
        jnp.where(ok, jnp.log(jnp.maximum(opac_bn, 1e-12)), -1e4),
        z, z, z, z], axis=-1).astype(jnp.float32)               # [B,N,Gp,8]

    r = jnp.broadcast_to(rgb[:, None, :, 0], pz.shape)
    g = jnp.broadcast_to(rgb[:, None, :, 1], pz.shape)
    b = jnp.broadcast_to(rgb[:, None, :, 2], pz.shape)
    ones = jnp.ones_like(dsafe)
    # TODO(synk): depth row is bf16-quantized (~3 digits); split it out as an
    # f32 operand if downstream depth consumers need more precision.
    rhs = jnp.stack([r, g, b, dsafe, ones, z, z, z], axis=2).astype(jnp.bfloat16)

    radius = 3.5 * sigma + 1.0
    return gprm, rhs, (u, v, radius, ok)


def _pixel_basis(width, hw_pad):
    idx = jnp.arange(hw_pad, dtype=jnp.int32)
    xpix = (idx % width).astype(jnp.float32) + 0.5
    ypix = (idx // width).astype(jnp.float32) + 0.5
    z = jnp.zeros_like(xpix)
    return jnp.stack([xpix, ypix, z, z, z, z, z, z], axis=0)    # (8, hw_pad)


def _tile_chunk_mask(u, v, radius, ok, width, hw_pad, tile_hw, tile_g):
    """Per (b, n, pixel-tile, gaussian-chunk) activity flag, flattened int32."""
    B, N, Gp = u.shape
    P = hw_pad // tile_hw
    K = Gp // tile_g
    start = jnp.arange(P, dtype=jnp.int32) * tile_hw
    end = start + tile_hw - 1
    row0 = start // width
    row1 = end // width
    multi = row1 > row0                                         # tile spans >1 row
    xmin = jnp.where(multi, 0, start % width).astype(jnp.float32)
    xmax = jnp.where(multi, width, end % width + 1).astype(jnp.float32)
    ymin = row0.astype(jnp.float32)
    ymax = row1.astype(jnp.float32) + 1.0
    lo_u, hi_u = u - radius, u + radius
    lo_v, hi_v = v - radius, v + radius
    ov = (ok[:, :, None, :]
          & (hi_u[:, :, None, :] >= xmin[None, None, :, None])
          & (lo_u[:, :, None, :] <= xmax[None, None, :, None])
          & (hi_v[:, :, None, :] >= ymin[None, None, :, None])
          & (lo_v[:, :, None, :] <= ymax[None, None, :, None]))  # [B,N,P,Gp]
    mask = ov.reshape(B, N, P, K, tile_g).any(axis=-1)           # [B,N,P,K]
    return mask.astype(jnp.int32).reshape(-1)


def _pick_tiles(max_tile_hw, max_tile_g):
    # Safe everywhere (v7x has only 64 MiB VMEM / TC); bump on 128 MiB parts.
    vmem_limit = 48 * 1024 * 1024
    try:
        cap = getattr(pltpu.get_tpu_info(), "vmem_capacity_bytes", None)
        if cap is not None and cap >= 100 * 1024 * 1024:         # v5e / v6e
            max_tile_g = max(max_tile_g, 1024)
            vmem_limit = 64 * 1024 * 1024
    except Exception:
        pass
    return max_tile_hw, max_tile_g, vmem_limit


def pallas_gsplat_render(gaussians, viewmats, intrinsics, height, width, sky,
                         max_tile_hw=2048, max_tile_g=512):
    """gaussians [B,G,14]; viewmats (world->cam) [B,N,4,4]; intrinsics [B,N,6];
    sky [B,N,H,W,3].  Returns slab [B, N, 8, H*W] (rgb, rgb_fg, depth, alpha)."""
    B, G, _ = gaussians.shape
    N = viewmats.shape[1]
    hw = height * width

    max_tile_hw, max_tile_g, vmem_limit = _pick_tiles(max_tile_hw, max_tile_g)
    tile_g = min(max_tile_g, _round_up(G, 128))   # G <= max_tile_g -> single chunk,
    g_pad = _round_up(G, tile_g)                  # gprm/rhs fetched once per camera
    tile_hw = min(max_tile_hw, _round_up(hw, 128))
    hw_pad = _round_up(hw, tile_hw)

    gaussians = gaussians.astype(jnp.float32)
    if g_pad != G:   # padded gaussians are invalid -> masked out / weight 0
        gaussians = jnp.pad(gaussians, ((0, 0), (0, g_pad - G), (0, 0)))

    gprm, rhs, (u, v, radius, ok) = _project_gaussians(gaussians, viewmats, intrinsics)
    pix = _pixel_basis(width, hw_pad)
    mask = _tile_chunk_mask(u, v, radius, ok, width, hw_pad, tile_hw, tile_g)

    sky_packed = jnp.transpose(sky.astype(jnp.float32).reshape(B, N, hw, 3),
                               (0, 1, 3, 2))                     # [B,N,3,hw]
    if hw_pad != hw:
        sky_packed = jnp.pad(sky_packed,
                             ((0, 0), (0, 0), (0, 0), (0, hw_pad - hw)))

    grid = (B, N, hw_pad // tile_hw, g_pad // tile_g)
    slab = pl.pallas_call(
        _splat_kernel,
        out_shape=jax.ShapeDtypeStruct((B, N, 8, hw_pad), jnp.float32),
        grid_spec=pltpu.PrefetchScalarGridSpec(
            num_scalar_prefetch=1,
            grid=grid,
            in_specs=[
                pl.BlockSpec((1, 1, tile_g, 8), lambda b, n, p, k, m: (b, n, k, 0)),
                pl.BlockSpec((1, 1, 8, tile_g), lambda b, n, p, k, m: (b, n, 0, k)),
                pl.BlockSpec((8, tile_hw), lambda b, n, p, k, m: (0, p)),
                pl.BlockSpec((1, 1, 3, tile_hw), lambda b, n, p, k, m: (b, n, 0, p)),
            ],
            out_specs=pl.BlockSpec((1, 1, 8, tile_hw),
                                   lambda b, n, p, k, m: (b, n, 0, p)),
            scratch_shapes=[pltpu.VMEM((8, tile_hw), jnp.float32)],
        ),
        compiler_params=pltpu.CompilerParams(
            dimension_semantics=("parallel", "parallel", "parallel", "arbitrary"),
            vmem_limit_bytes=vmem_limit),
    )(mask, gprm, rhs, pix, sky_packed)
    return slab[:, :, :, :hw]


class RGBRendererPallas:
    """JAX/Pallas port of scube RGBRenderer forward pass."""

    def __init__(self, hparams):
        self.hparams = hparams

    def prepare_rasterizing_params(self, batch):
        target_intrinsics = jnp.stack(batch["images_intrinsic"])             # [B,N,6]
        rast_intr = target_intrinsics / self.hparams["rasterizing_downsample"]
        target_poses = jnp.stack(batch["images_pose"])                        # [B,N,4,4]
        return {"target_poses": target_poses,
                "rasterizing_target_intrinsics": rast_intr}

    def forward(self, batch, network_output, skybox_images):
        assert self.hparams["with_render_branch"] and \
            "decoded_gaussians" in network_output
        rp = self.prepare_rasterizing_params(batch)
        poses = rp["target_poses"]
        intr = rp["rasterizing_target_intrinsics"]
        H = int(self.hparams["render_height"])
        W = int(self.hparams["render_width"])

        viewmats = jnp.linalg.inv(poses)                                      # glue
        gaussians = jnp.stack(network_output["decoded_gaussians"])            # [B,G,14]
        B = gaussians.shape[0]
        N = poses.shape[1]

        if self.hparams["use_skybox"]:
            sky = skybox_images.astype(jnp.float32).reshape(B, N, H, W, 3)
        else:
            sky = jnp.zeros((B, N, H, W, 3), jnp.float32)   # fused composite is a no-op

        slab = pallas_gsplat_render(gaussians, viewmats, intr, H, W, sky)     # [B,N,8,HW]
        slab = jnp.transpose(slab.reshape(B, N, 8, H, W), (0, 1, 3, 4, 2))    # [B,N,H,W,8]
        return {
            "pd_images": slab[..., 0:3],
            "pd_images_fg": slab[..., 3:6],
            "pd_depths": slab[..., 6:7],
            "pd_alphas": slab[..., 7:8],
        }


# ---------------------------------------------------------------------------
# Plain-JAX reference (same isotropic approximation) for a sanity check.
# ---------------------------------------------------------------------------
def _reference_render(gaussians, viewmats, intrinsics, H, W, sky):
    B, G, _ = gaussians.shape
    N = viewmats.shape[1]
    xyz = gaussians[:, :, 0:3]
    scales = gaussians[:, :, 3:6]
    opac = jnp.clip(gaussians[:, :, 10], 0.0, 1.0)
    rgb = gaussians[:, :, 11:14]
    R = viewmats[:, :, :3, :3]
    t = viewmats[:, :, :3, 3]
    cam = jnp.einsum("bnij,bgj->bngi", R, xyz) + t[:, :, None, :]
    px, py, pz = cam[..., 0], cam[..., 1], cam[..., 2]
    fx, fy = intrinsics[:, :, 0:1], intrinsics[:, :, 1:2]
    cx, cy = intrinsics[:, :, 2:3], intrinsics[:, :, 3:4]
    valid = pz > 1e-3
    dsafe = jnp.maximum(pz, 1e-3)
    u = fx * px / dsafe + cx
    v = fy * py / dsafe + cy
    mean_scale = jnp.mean(scales, axis=-1)[:, None, :]
    sigma = jnp.maximum(fx * mean_scale / dsafe, 0.3)
    inv2s2 = 0.5 / (sigma * sigma)
    idx = jnp.arange(H * W)
    xpix = (idx % W).astype(jnp.float32) + 0.5
    ypix = (idx // W).astype(jnp.float32) + 0.5
    du = xpix[None, None, :, None] - u[:, :, None, :]
    dv = ypix[None, None, :, None] - v[:, :, None, :]
    wmat = opac[:, None, None, :] * jnp.exp(-(du * du + dv * dv) * inv2s2[:, :, None, :])
    wmat = jnp.where(valid[:, :, None, :], wmat, 0.0)
    csum = jnp.einsum("bnpg,bgc->bnpc", wmat, rgb)
    dsum = jnp.einsum("bnpg,bng->bnp", wmat, dsafe)[..., None]
    wsum = jnp.sum(wmat, axis=-1, keepdims=True)
    alpha = 1.0 - jnp.exp(-wsum)
    inv_w = 1.0 / jnp.maximum(wsum, 1e-8)
    img_fg = csum * inv_w * alpha
    depth = dsum * inv_w
    img = img_fg + (1.0 - alpha) * sky.reshape(B, N, H * W, 3)
    return (img.reshape(B, N, H, W, 3), img_fg.reshape(B, N, H, W, 3),
            depth.reshape(B, N, H, W, 1), alpha.reshape(B, N, H, W, 1))


if __name__ == "__main__":
    key = jax.random.PRNGKey(0)
    B, N, G, H, W = 2, 2, 256, 16, 16
    down = 2.0
    hparams = dict(rasterizing_downsample=down, use_skybox=True,
                   with_render_branch=True, render_height=H, render_width=W)

    k1, k2, k3, k4, k5, k6 = jax.random.split(key, 6)

    # full-resolution intrinsics: [fx, fy, cx, cy, width, height]
    intr_full = jnp.array([W * down, H * down, W * down / 2, H * down / 2,
                           W * down, H * down], jnp.float32)
    intrinsics = jnp.broadcast_to(intr_full, (B, N, 6))

    # camera-to-world poses: identity rotation, small per-camera translation
    eye = jnp.eye(4, dtype=jnp.float32)
    t = 0.3 * jax.random.normal(k1, (B, N, 3), jnp.float32)
    poses = jnp.broadcast_to(eye, (B, N, 4, 4)).at[..., :3, 3].set(t)

    # decoded gaussians [B, G, 14]: xyz(3) scale(3) quat(4) opacity(1) rgb(3)
    xyz = jnp.concatenate([
        jax.random.uniform(k2, (B, G, 2), minval=-1.5, maxval=1.5),
        jax.random.uniform(k3, (B, G, 1), minval=2.0, maxval=6.0)], axis=-1)
    scales = jax.random.uniform(k4, (B, G, 3), minval=0.05, maxval=0.25)
    quats = jax.random.normal(k5, (B, G, 4))
    quats = quats / jnp.linalg.norm(quats, axis=-1, keepdims=True)
    opacity = jax.random.uniform(k6, (B, G, 1), minval=0.3, maxval=0.9)
    rgb = jax.random.uniform(jax.random.fold_in(key, 7), (B, G, 3))
    gaussians = jnp.concatenate([xyz, scales, quats, opacity, rgb],
                                axis=-1).astype(jnp.float32)

    # synthetic skybox output (skybox.sample_batch is an external module)
    sky = jax.random.uniform(jax.random.fold_in(key, 8), (B, N, H, W, 3),
                             jnp.float32)

    batch = {"images_intrinsic": [intrinsics[b] for b in range(B)],
             "images_pose": [poses[b] for b in range(B)]}
    network_output = {"decoded_gaussians": [gaussians[b] for b in range(B)]}

    renderer = RGBRendererPallas(hparams)
    out = renderer.forward(batch, network_output, sky)
    jax.block_until_ready(out)

    assert out["pd_images"].shape == (B, N, H, W, 3)
    assert out["pd_images_fg"].shape == (B, N, H, W, 3)
    assert out["pd_alphas"].shape == (B, N, H, W, 1)
    assert out["pd_depths"].shape == (B, N, H, W, 1)
    assert bool(jnp.all(jnp.isfinite(out["pd_images"])))
    assert bool(jnp.all((out["pd_alphas"] >= 0.0) & (out["pd_alphas"] <= 1.0)))

    # sanity check against a plain-JAX implementation of the same approximation
    viewmats = jnp.linalg.inv(poses)
    ref_img, ref_fg, ref_depth, ref_alpha = _reference_render(
        gaussians, viewmats, intrinsics / down, H, W, sky)
    assert float(jnp.max(jnp.abs(out["pd_images"] - ref_img))) < 1e-1
    assert float(jnp.max(jnp.abs(out["pd_images_fg"] - ref_fg))) < 1e-1
    assert float(jnp.max(jnp.abs(out["pd_alphas"] - ref_alpha))) < 1e-1
    assert float(jnp.max(jnp.abs(out["pd_depths"] - ref_depth))) < 2e-1

    print("KERNEL_OK")
</pallas_src>

<mosaic_0001>
module attributes {stable_mosaic.version = 11 : i64} {
  func.func @_splat_kernel(%arg0: i32, %arg1: i32, %arg2: i32, %arg3: i32, %arg4: memref<4xi32, #tpu.memory_space<smem>>, %arg5: memref<1x1x256x8xf32, #tpu.memory_space<vmem>>, %arg6: memref<1x1x8x256xbf16, #tpu.memory_space<vmem>>, %arg7: memref<8x256xf32, #tpu.memory_space<vmem>>, %arg8: memref<1x1x3x256xf32, #tpu.memory_space<vmem>>, %arg9: memref<1x1x8x256xf32, #tpu.memory_space<vmem>>, %arg10: memref<8x256xf32, #tpu.memory_space<vmem>>) attributes {dimension_semantics = [#tpu.dimension_semantics<parallel>, #tpu.dimension_semantics<parallel>, #tpu.dimension_semantics<parallel>, #tpu.dimension_semantics<arbitrary>], iteration_bounds = array<i64: 2, 2, 1, 1>, scalar_prefetch = 1 : i64, scratch_operands = 1 : i64, tpu.core_type = #tpu.core_type<tc>, window_params = [{transform_indices = @transform_0, window_bounds = array<i64: 1, 1, 256, 8>}, {transform_indices = @transform_1, window_bounds = array<i64: 1, 1, 8, 256>}, {transform_indices = @transform_2, window_bounds = array<i64: 8, 256>}, {transform_indices = @transform_3, window_bounds = array<i64: 1, 1, 3, 256>}, {transform_indices = @transform_4, window_bounds = array<i64: 1, 1, 8, 256>}]} {
    %c0_i32 = arith.constant 0 : i32
    %0 = arith.cmpi eq, %arg3, %c0_i32 : i32
    %1 = arith.extui %0 : i1 to i32
    %c0_i32_0 = arith.constant 0 : i32
    %2 = arith.cmpi ne, %1, %c0_i32_0 : i32
    scf.if %2 {
      %cst = arith.constant 0.000000e+00 : f32
      %17 = vector.broadcast %cst : f32 to vector<8x256xf32>
      %c0 = arith.constant 0 : index
      %c0_6 = arith.constant 0 : index
      %18 = vector.load %arg10[%c0, %c0_6] : memref<8x256xf32, #tpu.memory_space<vmem>>, vector<8x256xf32>
      tpu.vector_store %arg10[%c0, %c0_6], %17 {strides = array<i32>} : memref<8x256xf32, #tpu.memory_space<vmem>>, vector<8x256xf32>,
    } else {
    }
    %c2_i32 = arith.constant 2 : i32
    %3 = arith.muli %arg0, %c2_i32 : i32
    %4 = arith.addi %3, %arg1 : i32
    %c1_i32 = arith.constant 1 : i32
    %5 = arith.muli %4, %c1_i32 : i32
    %6 = arith.addi %5, %arg2 : i32
    %c1_i32_1 = arith.constant 1 : i32
    %7 = arith.muli %6, %c1_i32_1 : i32
    %8 = arith.addi %7, %arg3 : i32
    %9 = arith.index_cast %8 : i32 to index
    %10 = memref.load %arg4[%9] : memref<4xi32, #tpu.memory_space<smem>>
    %c0_i32_2 = arith.constant 0 : i32
    %11 = arith.cmpi ne, %10, %c0_i32_2 : i32
    %12 = arith.extui %11 : i1 to i32
    %c0_i32_3 = arith.constant 0 : i32
    %13 = arith.cmpi ne, %12, %c0_i32_3 : i32
    scf.if %13 {
      %c0 = arith.constant 0 : index
      %c0_6 = arith.constant 0 : index
      %c0_7 = arith.constant 0 : index
      %c0_8 = arith.constant 0 : index
      %17 = vector.load %arg5[%c0, %c0_6, %c0_7, %c0_8] : memref<1x1x256x8xf32, #tpu.memory_space<vmem>>, vector<1x1x256x8xf32>
      %18 = vector.shape_cast %17 : vector<1x1x256x8xf32> to vector<256x8xf32>
      %19 = vector.extract_strided_slice %18 {offsets = [0, 0], sizes = [256, 1], strides = [1, 1]} : vector<256x8xf32> to vector<256x1xf32>
      %20 = vector.extract_strided_slice %18 {offsets = [0, 1], sizes = [256, 1], strides = [1, 1]} : vector<256x8xf32> to vector<256x1xf32>
      %21 = vector.extract_strided_slice %18 {offsets = [0, 2], sizes = [256, 1], strides = [1, 1]} : vector<256x8xf32> to vector<256x1xf32>
      %22 = vector.extract_strided_slice %18 {offsets = [0, 3], sizes = [256, 1], strides = [1, 1]} : vector<256x8xf32> to vector<256x1xf32>
      %c0_9 = arith.constant 0 : index
      %c0_10 = arith.constant 0 : index
      %23 = vector.load %arg7[%c0_9, %c0_10] : memref<8x256xf32, #tpu.memory_space<vmem>>, vector<1x256xf32>
      %c1 = arith.constant 1 : index
      %c0_11 = arith.constant 0 : index
      %24 = vector.load %arg7[%c1, %c0_11] : memref<8x256xf32, #tpu.memory_space<vmem>>, vector<1x256xf32>
      %25 = vector.broadcast %23 : vector<1x256xf32> to vector<256x256xf32>
      %26 = vector.broadcast %19 : vector<256x1xf32> to vector<256x256xf32>
      %27 = arith.subf %25, %26 : vector<256x256xf32>
      %28 = vector.broadcast %24 : vector<1x256xf32> to vector<256x256xf32>
      %29 = vector.broadcast %20 : vector<256x1xf32> to vector<256x256xf32>
      %30 = arith.subf %28, %29 : vector<256x256xf32>
      %31 = arith.mulf %27, %27 : vector<256x256xf32>
      %32 = arith.mulf %30, %30 : vector<256x256xf32>
      %33 = arith.addf %31, %32 : vector<256x256xf32>
      %34 = vector.broadcast %21 : vector<256x1xf32> to vector<256x256xf32>
      %35 = arith.mulf %33, %34 : vector<256x256xf32>
      %36 = vector.broadcast %22 : vector<256x1xf32> to vector<256x256xf32>
      %37 = arith.addf %35, %36 : vector<256x256xf32>
      %38 = arith.truncf %37 : vector<256x256xf32> to vector<256x256xbf16>
      %39 = math.exp %38 : vector<256x256xbf16>
      %c0_12 = arith.constant 0 : index
      %c0_13 = arith.constant 0 : index
      %40 = vector.load %arg10[%c0_12, %c0_13] : memref<8x256xf32, #tpu.memory_space<vmem>>, vector<8x256xf32>
      %c0_14 = arith.constant 0 : index
      %c0_15 = arith.constant 0 : index
      %c0_16 = arith.constant 0 : index
      %c0_17 = arith.constant 0 : index
      %41 = vector.load %arg6[%c0_14, %c0_15, %c0_16, %c0_17] : memref<1x1x8x256xbf16, #tpu.memory_space<vmem>>, vector<1x1x8x256xbf16>
      %42 = vector.shape_cast %41 : vector<1x1x8x256xbf16> to vector<8x256xbf16>
      %cst = arith.constant dense<0.000000e+00> : vector<8x256xf32>
      %43 = tpu.matmul %42, %39, %cst {dimension_numbers = #tpu.dot_dimension_numbers<[1], [0], [0], [1], [0, 0, 1, 1], [], []>} : vector<8x256xbf16>, vector<256x256xbf16>, vector<8x256xf32> -> vector<8x256xf32>
      %44 = arith.addf %40, %43 : vector<8x256xf32>
      %c0_18 = arith.constant 0 : index
      %c0_19 = arith.constant 0 : index
      %45 = vector.load %arg10[%c0_18, %c0_19] : memref<8x256xf32, #tpu.memory_space<vmem>>, vector<8x256xf32>
      tpu.vector_store %arg10[%c0_18, %c0_19], %44 {strides = array<i32>} : memref<8x256xf32, #tpu.memory_space<vmem>>, vector<8x256xf32>,
    } else {
    }
    %c0_i32_4 = arith.constant 0 : i32
    %14 = arith.cmpi eq, %arg3, %c0_i32_4 : i32
    %15 = arith.extui %14 : i1 to i32
    %c0_i32_5 = arith.constant 0 : i32
    %16 = arith.cmpi ne, %15, %c0_i32_5 : i32
    scf.if %16 {
      %c0 = arith.constant 0 : index
      %c0_6 = arith.constant 0 : index
      %17 = vector.load %arg10[%c0, %c0_6] : memref<8x256xf32, #tpu.memory_space<vmem>>, vector<8x256xf32>
      %18 = vector.extract_strided_slice %17 {offsets = [0, 0], sizes = [3, 256], strides = [1, 1]} : vector<8x256xf32> to vector<3x256xf32>
      %19 = vector.extract_strided_slice %17 {offsets = [3, 0], sizes = [1, 256], strides = [1, 1]} : vector<8x256xf32> to vector<1x256xf32>
      %20 = vector.extract_strided_slice %17 {offsets = [4, 0], sizes = [1, 256], strides = [1, 1]} : vector<8x256xf32> to vector<1x256xf32>
      %cst = arith.constant 0.000000e+00 : f32
      %21 = vector.broadcast %cst : f32 to vector<1x256xf32>
      %22 = arith.subf %21, %20 : vector<1x256xf32>
      %23 = math.exp %22 : vector<1x256xf32>
      %cst_7 = arith.constant 1.000000e+00 : f32
      %24 = vector.broadcast %cst_7 : f32 to vector<1x256xf32>
      %25 = arith.subf %24, %23 : vector<1x256xf32>
      %cst_8 = arith.constant 9.99999993E-9 : f32
      %26 = vector.broadcast %cst_8 : f32 to vector<1x256xf32>
      %27 = arith.maximumf %20, %26 : vector<1x256xf32>
      %28 = tpu.reciprocal %27 {approx = true} : vector<1x256xf32> -> vector<1x256xf32>
      %29 = arith.mulf %28, %25 : vector<1x256xf32>
      %30 = vector.broadcast %29 : vector<1x256xf32> to vector<3x256xf32>
      %31 = arith.mulf %18, %30 : vector<3x256xf32>
      %32 = arith.mulf %19, %28 : vector<1x256xf32>
      %c0_9 = arith.constant 0 : index
      %c0_10 = arith.constant 0 : index
      %c0_11 = arith.constant 0 : index
      %c0_12 = arith.constant 0 : index
      %33 = vector.load %arg8[%c0_9, %c0_10, %c0_11, %c0_12] : memref<1x1x3x256xf32, #tpu.memory_space<vmem>>, vector<1x1x3x256xf32>
      %34 = vector.shape_cast %33 : vector<1x1x3x256xf32> to vector<3x256xf32>
      %cst_13 = arith.constant 1.000000e+00 : f32
      %35 = vector.broadcast %cst_13 : f32 to vector<1x256xf32>
      %36 = arith.subf %35, %25 : vector<1x256xf32>
      %37 = vector.broadcast %36 : vector<1x256xf32> to vector<3x256xf32>
      %38 = arith.mulf %37, %34 : vector<3x256xf32>
      %39 = arith.addf %31, %38 : vector<3x256xf32>
      %40 = tpu.concatenate %39, %31, %32, %25 in 0 : vector<3x256xf32>, vector<3x256xf32>, vector<1x256xf32>, vector<1x256xf32> -> vector<8x256xf32>
      %c0_14 = arith.constant 0 : index
      %c0_15 = arith.constant 0 : index
      %c0_16 = arith.constant 0 : index
      %c0_17 = arith.constant 0 : index
      %41 = vector.load %arg9[%c0_14, %c0_15, %c0_16, %c0_17] : memref<1x1x8x256xf32, #tpu.memory_space<vmem>>, vector<1x1x8x256xf32>
      %42 = vector.shape_cast %41 : vector<1x1x8x256xf32> to vector<8x256xf32>
      %43 = vector.shape_cast %40 : vector<8x256xf32> to vector<1x1x8x256xf32>
      tpu.vector_store %arg9[%c0_14, %c0_15, %c0_16, %c0_17], %43 {strides = array<i32>} : memref<1x1x8x256xf32, #tpu.memory_space<vmem>>, vector<1x1x8x256xf32>,
    } else {
    }
    return
  }
  func.func @transform_0(%arg0: i32, %arg1: i32, %arg2: i32, %arg3: i32, %arg4: memref<4xi32, #tpu.memory_space<smem>>) -> (i32, i32, i32, i32) {
    %c0_i32 = arith.constant 0 : i32
    %c0_i32_0 = arith.constant 0 : i32
    return %arg0, %arg1, %arg3, %c0_i32 : i32, i32, i32, i32
  }
  func.func @transform_1(%arg0: i32, %arg1: i32, %arg2: i32, %arg3: i32, %arg4: memref<4xi32, #tpu.memory_space<smem>>) -> (i32, i32, i32, i32) {
    %c0_i32 = arith.constant 0 : i32
    %c0_i32_0 = arith.constant 0 : i32
    return %arg0, %arg1, %c0_i32, %arg3 : i32, i32, i32, i32
  }
  func.func @transform_2(%arg0: i32, %arg1: i32, %arg2: i32, %arg3: i32, %arg4: memref<4xi32, #tpu.memory_space<smem>>) -> (i32, i32) {
    %c0_i32 = arith.constant 0 : i32
    %c0_i32_0 = arith.constant 0 : i32
    return %c0_i32, %arg2 : i32, i32
  }
  func.func @transform_3(%arg0: i32, %arg1: i32, %arg2: i32, %arg3: i32, %arg4: memref<4xi32, #tpu.memory_space<smem>>) -> (i32, i32, i32, i32) {
    %c0_i32 = arith.constant 0 : i32
    %c0_i32_0 = arith.constant 0 : i32
    return %arg0, %arg1, %c0_i32, %arg2 : i32, i32, i32, i32
  }
  func.func @transform_4(%arg0: i32, %arg1: i32, %arg2: i32, %arg3: i32, %arg4: memref<4xi32, #tpu.memory_space<smem>>) -> (i32, i32, i32, i32) {
    %c0_i32 = arith.constant 0 : i32
    %c0_i32_0 = arith.constant 0 : i32
    return %arg0, %arg1, %c0_i32, %arg2 : i32, i32, i32, i32
  }
}

</mosaic_0001>

<llo_original>
// kernel: tpu_custom_call.1
$region0: #{tpu_custom_call.1}
  #allocation0 [shape = 'u32[]', space=smem, size = 0x4, offset = 0x4, fixed_abs, tag = 'smem constant byte address 0x4 - core index']
  #allocation1 [shape = 'u32[144,128]{1,0:T(1,128)}', space=vmem, size = 0x12000, scoped, tag = 'internal scratch']
  #allocation2 [shape = 'f32[8,256]{1,0:T(8,128)}', space=vmem, size = 0x2000, scoped, tag = 'scratch operand']
  #allocation3 [shape = 's32[1]{0}', space=sflag, size = 0x4, scoped, tag = 'scoped memory for tpu_custom_call.1']
  #allocation4 [shape = 'u8[512]{0}', space=smem, size = 0x200, scoped, tag = 'prefetched SMEM operand 0']
  %s0 = inlined_call_operand.vmem [shape: s32[4], index: 0, kind: input, shape index: {}]
  %s1 = inlined_call_operand.vmem [shape: f32[2,2,256,8], index: 1, kind: input, shape index: {}]
  %s2 = inlined_call_operand.vmem [shape: bf16[2,2,8,256], index: 2, kind: input, shape index: {}]
  %s3 = inlined_call_operand.vmem [shape: f32[8,256], index: 3, kind: input, shape index: {}]
  %s4 = inlined_call_operand.vmem [shape: f32[2,2,3,256], index: 4, kind: input, shape index: {}]
  %s5 = inlined_call_operand.hbm [shape: f32[2,2,8,256], index: 5, kind: output, shape index: {}]
  %s6 = sld [smem:[#allocation0]]
  $region61: #{tpu_custom_call.1} parent=0
    _
  %s8 = ssub.s32 1, %s6
  %s9 = scalar_select 0, %s8, %s6
  %s10 = sshll.u32 %s0, 4
  %s11 = int_to_ptr.vmem [resolvable:$true] %s10
  %13 = dma.vmem_to_smem %s11, 16, [#allocation4], [#allocation3]
  %14 = dma.done [#allocation3], 16
  %15 = sfence
  $region1: #{tpu_custom_call.1} parent=0
    #allocation5 [shape = 'u8[16384]{0}', space=vmem, size = 0x4000, scoped, tag = 'output window, operand 0']
    #allocation6 [shape = 's32[2]{0}', space=sflag, size = 0x8, scoped, tag = 'scoped memory for tpu_custom_call.1']
    %16 = vsyncpa [#allocation6], 0
    %s17 = scalar_lea.sflag [#allocation6], 1
    %18 = vsyncpa %s17, 0
    loop: start=0, step=1, limit=6
    $region2: #{tpu_custom_call.1} parent=1 // loop_pre_header
      _
    $region3: #{tpu_custom_call.1} parent=1 // loop_header
      %s20 = sphi 0, %s24
      %p21 = scmp.ge.s32.totalorder %s20, 6
      %s27 = sphi 0, %s53
      %s28 = sphi 0, %s49
      %s29 = sphi 0, %s45
      %s30 = sphi 0, %s41
      %s31 = sphi 0, %s27
      %s32 = sphi 0, %s28
      %s33 = sphi 0, %s29
      %s34 = sphi 0, %s30
      %s35 = sphi 0, %s31
      %s36 = sphi 0, %s32
      %s37 = sphi 0, %s33
      %s38 = sphi 0, %s34
      %s60 = sphi 0, %s62
      %s63 = sphi 0, %s60
      %s64 = sphi 0, %s63
      %s80 = sphi 0, %s64
      %s90 = sphi 0, %s92
      %s93 = sphi 0, %s90
      %s94 = sphi 0, %s93
      %s110 = sphi 0, %s94
      %s116 = sphi 0, %s118
      %s119 = sphi 0, %s116
      %s120 = sphi 0, %s119
      %s136 = sphi 0, %s120
      %s146 = sphi 0, %s148
      %s149 = sphi 0, %s146
      %s150 = sphi 0, %s149
      %s166 = sphi 0, %s150
      %s176 = sphi 0, %s178
      %s179 = sphi 0, %s176
      %s180 = sphi 0, %s179
      %s196 = sphi 0, %s180
    $region4: #{tpu_custom_call.1} parent=1 // loop_header_branch
      %23 = sbr.rel (%p21) target = $region8
    $region5: #{tpu_custom_call.1} parent=1 // loop_body
      %s25 = ssub.s32 %s20, 1
      %s26 = ssub.s32 %s20, 2
      %s39 = sadd.s32 1, %s30
      %p40 = scmp.ge.s32.totalorder %s39, 1
      %s41 = scalar_select %p40, 0, %s39
      %s42 = sadd.s32 1, %s29
      %s43 = scalar_select %p40, %s42, %s29
      %p44 = scmp.ge.s32.totalorder %s43, 1
      %s45 = scalar_select %p44, 0, %s43
      %s46 = sadd.s32 1, %s28
      %s47 = scalar_select %p44, %s46, %s28
      %p48 = scmp.ge.s32.totalorder %s47, 2
      %s49 = scalar_select %p48, 0, %s47
      %s50 = sadd.s32 1, %s27
      %s51 = scalar_select %p48, %s50, %s27
      %p52 = scmp.ge.s32.totalorder %s51, 2
      %s53 = scalar_select %p52, 0, %s51
      %s54 = ssub.s32 %s27, %s53
      %s55 = ssub.s32 %s28, %s49
      %s56 = sor.u32 %s54, %s55
      %s57 = ssub.s32 %s30, %s41
      %s58 = sor.u32 %s56, %s57
      %p59 = scmp.eq.s32.totalorder %s58, 0
      %s61 = sadd.s32 %s60, 1
      %s62 = scalar_select %p59, %s60, %s61
      %p65 = pneg %p59
      %p66 = scmp.eq.s32.totalorder %s20, 3
      %p67 = por %p65, %p66
      %p68 = scmp.ne.s32.totalorder %s60, %s63
      %p69 = scmp.eq.s32.totalorder %s20, 0
      %p70 = por %p68, %p69
      %p71 = scmp.ne.s32.totalorder %s60, %s63
      %p72 = scmp.eq.s32.totalorder %s25, 3
      %p73 = por %p71, %p72
      %p74 = scmp.ne.s32.totalorder %s63, %s64
      %p75 = scmp.eq.s32.totalorder %s25, 0
      %p76 = por %p74, %p75
      %p77 = scmp.ne.s32.totalorder %s63, %s64
      %p78 = scmp.eq.s32.totalorder %s26, 3
      %p79 = por %p77, %p78
      %p81 = scmp.ne.s32.totalorder %s64, %s80
      %p82 = scmp.eq.s32.totalorder %s26, 0
      %p83 = por %p81, %p82
      %s84 = ssub.s32 %s27, %s53
      %s85 = ssub.s32 %s28, %s49
      %s86 = sor.u32 %s84, %s85
      %s87 = ssub.s32 %s30, %s41
      %s88 = sor.u32 %s86, %s87
      %p89 = scmp.eq.s32.totalorder %s88, 0
      %s91 = sadd.s32 %s90, 1
      %s92 = scalar_select %p89, %s90, %s91
      %p95 = pneg %p89
      %p96 = scmp.eq.s32.totalorder %s20, 3
      %p97 = por %p95, %p96
      %p98 = scmp.ne.s32.totalorder %s90, %s93
      %p99 = scmp.eq.s32.totalorder %s20, 0
      %p100 = por %p98, %p99
      %p101 = scmp.ne.s32.totalorder %s90, %s93
      %p102 = scmp.eq.s32.totalorder %s25, 3
      %p103 = por %p101, %p102
      %p104 = scmp.ne.s32.totalorder %s93, %s94
      %p105 = scmp.eq.s32.totalorder %s25, 0
      %p106 = por %p104, %p105
      %p107 = scmp.ne.s32.totalorder %s93, %s94
      %p108 = scmp.eq.s32.totalorder %s26, 3
      %p109 = por %p107, %p108
      %p111 = scmp.ne.s32.totalorder %s94, %s110
      %p112 = scmp.eq.s32.totalorder %s26, 0
      %p113 = por %p111, %p112
      %s114 = ssub.s32 %s29, %s45
      %p115 = scmp.eq.s32.totalorder %s114, 0
      %s117 = sadd.s32 %s116, 1
      %s118 = scalar_select %p115, %s116, %s117
      %p121 = pneg %p115
      %p122 = scmp.eq.s32.totalorder %s20, 3
      %p123 = por %p121, %p122
      %p124 = scmp.ne.s32.totalorder %s116, %s119
      %p125 = scmp.eq.s32.totalorder %s20, 0
      %p126 = por %p124, %p125
      %p127 = scmp.ne.s32.totalorder %s116, %s119
      %p128 = scmp.eq.s32.totalorder %s25, 3
      %p129 = por %p127, %p128
      %p130 = scmp.ne.s32.totalorder %s119, %s120
      %p131 = scmp.eq.s32.totalorder %s25, 0
      %p132 = por %p130, %p131
      %p133 = scmp.ne.s32.totalorder %s119, %s120
      %p134 = scmp.eq.s32.totalorder %s26, 3
      %p135 = por %p133, %p134
      %p137 = scmp.ne.s32.totalorder %s120, %s136
      %p138 = scmp.eq.s32.totalorder %s26, 0
      %p139 = por %p137, %p138
      %s140 = ssub.s32 %s27, %s53
      %s141 = ssub.s32 %s28, %s49
      %s142 = sor.u32 %s140, %s141
      %s143 = ssub.s32 %s29, %s45
      %s144 = sor.u32 %s142, %s143
      %p145 = scmp.eq.s32.totalorder %s144, 0
      %s147 = sadd.s32 %s146, 1
      %s148 = scalar_select %p145, %s146, %s147
      %p151 = pneg %p145
      %p152 = scmp.eq.s32.totalorder %s20, 3
      %p153 = por %p151, %p152
      %p154 = scmp.ne.s32.totalorder %s146, %s149
      %p155 = scmp.eq.s32.totalorder %s20, 0
      %p156 = por %p154, %p155
      %p157 = scmp.ne.s32.totalorder %s146, %s149
      %p158 = scmp.eq.s32.totalorder %s25, 3
      %p159 = por %p157, %p158
      %p160 = scmp.ne.s32.totalorder %s149, %s150
      %p161 = scmp.eq.s32.totalorder %s25, 0
      %p162 = por %p160, %p161
      %p163 = scmp.ne.s32.totalorder %s149, %s150
      %p164 = scmp.eq.s32.totalorder %s26, 3
      %p165 = por %p163, %p164
      %p167 = scmp.ne.s32.totalorder %s150, %s166
      %p168 = scmp.eq.s32.totalorder %s26, 0
      %p169 = por %p167, %p168
      %s170 = ssub.s32 %s27, %s53
      %s171 = ssub.s32 %s28, %s49
      %s172 = sor.u32 %s170, %s171
      %s173 = ssub.s32 %s29, %s45
      %s174 = sor.u32 %s172, %s173
      %p175 = scmp.eq.s32.totalorder %s174, 0
      %s177 = sadd.s32 %s176, 1
      %s178 = scalar_select %p175, %s176, %s177
      %p181 = pneg %p175
      %p182 = scmp.eq.s32.totalorder %s20, 3
      %p183 = por %p181, %p182
      %p184 = scmp.ne.s32.totalorder %s176, %s179
      %p185 = scmp.eq.s32.totalorder %s20, 0
      %p186 = por %p184, %p185
      %p187 = scmp.ne.s32.totalorder %s176, %s179
      %p188 = scmp.eq.s32.totalorder %s25, 3
      %p189 = por %p187, %p188
      %p190 = scmp.ne.s32.totalorder %s179, %s180
      %p191 = scmp.eq.s32.totalorder %s25, 0
      %p192 = por %p190, %p191
      %p193 = scmp.ne.s32.totalorder %s179, %s180
      %p194 = scmp.eq.s32.totalorder %s26, 3
      %p195 = por %p193, %p194
      %p197 = scmp.ne.s32.totalorder %s180, %s196
      %p198 = scmp.eq.s32.totalorder %s26, 0
      %p199 = por %p197, %p198
      %p200 = scmp.le.s32.totalorder 1, %s20
      %p201 = scmp.lt.s32.totalorder %s20, 5
      %p202 = pnand %p200, %p201
      %p203 = pneg %p202
      // Predicated region
      $region9: #{tpu_custom_call.1} parent=5 // pred_check
        _
      $region10: #{tpu_custom_call.1} parent=5 // pred_check_branch
        %205 = sbr.rel (%p202) target = $region12
      $region11: #{tpu_custom_call.1} parent=5 // pred_region
        %s206 = ssub.s32 %s20, 1
        // Predicated region
        $region13: #{tpu_custom_call.1} parent=11 // pred_check
          %p207 = pneg %p132
        $region14: #{tpu_custom_call.1} parent=11 // pred_check_branch
          %209 = sbr.rel (%p207) target = $region16
        $region15: #{tpu_custom_call.1} parent=11 // pred_region
          %s210 = smul.u32 2, %s33
          %p211 = scmp.lt.s32.totalorder %s210, 1
          %s212 = scalar_select %p211, %s210, 1
          %s213 = smul.addr %s212, 8
          %s214 = scalar_lea.vmem %s3, %s213
          %s215 = smul.u32 2, %s33
        $region16: #{tpu_custom_call.1} parent=11 // pred_fallthru
          _
      $region12: #{tpu_custom_call.1} parent=5 // pred_fallthru
        _
      %p216 = scmp.lt.s32.totalorder %s20, 4
      // Predicated region
      $region17: #{tpu_custom_call.1} parent=5 // pred_check
        %p217 = pneg %p216
      $region18: #{tpu_custom_call.1} parent=5 // pred_check_branch
        %219 = sbr.rel (%p217) target = $region20
      $region19: #{tpu_custom_call.1} parent=5 // pred_region
        // Predicated region
        $region21: #{tpu_custom_call.1} parent=19 // pred_check
          %p220 = pneg %p70
        $region22: #{tpu_custom_call.1} parent=19 // pred_check_branch
          %222 = sbr.rel (%p220) target = $region24
        $region23: #{tpu_custom_call.1} parent=19 // pred_region
          %s223 = smul.u32 32, %s30
          %p224 = scmp.lt.s32.totalorder %s27, 1
          %s225 = scalar_select %p224, %s27, 1
          %p226 = scmp.lt.s32.totalorder %s28, 1
          %s227 = scalar_select %p226, %s28, 1
          %p228 = scmp.lt.s32.totalorder %s223, 31
          %s229 = scalar_select %p228, %s223, 31
          %s230 = smul.addr %s227, 32
          %s231 = sadd.s32 %s229, %s230
          %s232 = smul.addr %s225, 64
          %s233 = sadd.s32 %s231, %s232
          %s234 = smul.addr %s233, 8
          %s235 = scalar_lea.vmem %s1, %s234
          %s236 = smul.u32 32, %s30
        $region24: #{tpu_custom_call.1} parent=19 // pred_fallthru
          _
        // Predicated region
        $region25: #{tpu_custom_call.1} parent=19 // pred_check
          %p237 = pneg %p100
        $region26: #{tpu_custom_call.1} parent=19 // pred_check_branch
          %239 = sbr.rel (%p237) target = $region28
        $region27: #{tpu_custom_call.1} parent=19 // pred_region
          %s240 = smul.u32 2, %s30
          %p241 = scmp.lt.s32.totalorder %s27, 1
          %s242 = scalar_select %p241, %s27, 1
          %p243 = scmp.lt.s32.totalorder %s28, 1
          %s244 = scalar_select %p243, %s28, 1
          %p245 = scmp.lt.s32.totalorder %s240, 1
          %s246 = scalar_select %p245, %s240, 1
          %s247 = smul.addr %s244, 2
          %s248 = sadd.s32 %s246, %s247
          %s249 = smul.addr %s242, 4
          %s250 = sadd.s32 %s248, %s249
          %s251 = smul.addr %s250, 4
          %s252 = scalar_lea.vmem %s2, %s251
          %s253 = smul.u32 2, %s30
        $region28: #{tpu_custom_call.1} parent=19 // pred_fallthru
          _
        // Predicated region
        $region29: #{tpu_custom_call.1} parent=19 // pred_check
          %p254 = pneg %p156
        $region30: #{tpu_custom_call.1} parent=19 // pred_check_branch
          %256 = sbr.rel (%p254) target = $region32
        $region31: #{tpu_custom_call.1} parent=19 // pred_region
          %s257 = smul.u32 2, %s29
          %p258 = scmp.lt.s32.totalorder %s27, 1
          %s259 = scalar_select %p258, %s27, 1
          %p260 = scmp.lt.s32.totalorder %s28, 1
          %s261 = scalar_select %p260, %s28, 1
          %p262 = scmp.lt.s32.totalorder %s257, 1
          %s263 = scalar_select %p262, %s257, 1
          %s264 = smul.addr %s261, 2
          %s265 = sadd.s32 %s263, %s264
          %s266 = smul.addr %s259, 4
          %s267 = sadd.s32 %s265, %s266
          %s268 = smul.addr %s267, 4
          %s269 = scalar_lea.vmem %s4, %s268
          %s270 = smul.u32 2, %s29
        $region32: #{tpu_custom_call.1} parent=19 // pred_fallthru
          _
      $region20: #{tpu_custom_call.1} parent=5 // pred_fallthru
        _
      %p271 = scmp.le.s32.totalorder 1, %s20
      %p272 = scmp.lt.s32.totalorder %s20, 5
      %p273 = pnand %p271, %p272
      %p274 = pneg %p273
      // Predicated region
      $region33: #{tpu_custom_call.1} parent=5 // pred_check
        _
      $region34: #{tpu_custom_call.1} parent=5 // pred_check_branch
        %276 = sbr.rel (%p273) target = $region36
      $region35: #{tpu_custom_call.1} parent=5 // pred_region
        %s277 = ssub.s32 %s20, 1
        %s278 = smul.u32 32, %s34
        %p279 = scmp.lt.s32.totalorder %s31, 1
        %s280 = scalar_select %p279, %s31, 1
        %p281 = scmp.lt.s32.totalorder %s32, 1
        %s282 = scalar_select %p281, %s32, 1
        %p283 = scmp.lt.s32.totalorder %s278, 31
        %s284 = scalar_select %p283, %s278, 31
        %s285 = smul.addr %s282, 32
        %s286 = sadd.s32 %s284, %s285
        %s287 = smul.addr %s280, 64
        %s288 = sadd.s32 %s286, %s287
        %s289 = smul.addr %s288, 8
        %s290 = scalar_lea.vmem %s1, %s289
        %p291 = pneg %p76
        %p292 = pneg %p73
        %s293 = smul.u32 2, %s34
        %p294 = scmp.lt.s32.totalorder %s31, 1
        %s295 = scalar_select %p294, %s31, 1
        %p296 = scmp.lt.s32.totalorder %s32, 1
        %s297 = scalar_select %p296, %s32, 1
        %p298 = scmp.lt.s32.totalorder %s293, 1
        %s299 = scalar_select %p298, %s293, 1
        %s300 = smul.addr %s297, 2
        %s301 = sadd.s32 %s299, %s300
        %s302 = smul.addr %s295, 4
        %s303 = sadd.s32 %s301, %s302
        %s304 = smul.addr %s303, 4
        %s305 = scalar_lea.vmem %s2, %s304
        %p306 = pneg %p106
        %p307 = pneg %p103
        %s308 = smul.u32 2, %s33
        %p309 = scmp.lt.s32.totalorder %s308, 1
        %s310 = scalar_select %p309, %s308, 1
        %s311 = smul.addr %s310, 8
        %s312 = scalar_lea.vmem %s3, %s311
        %p313 = pneg %p132
        %p314 = pneg %p129
        %s315 = smul.u32 2, %s33
        %p316 = scmp.lt.s32.totalorder %s31, 1
        %s317 = scalar_select %p316, %s31, 1
        %p318 = scmp.lt.s32.totalorder %s32, 1
        %s319 = scalar_select %p318, %s32, 1
        %p320 = scmp.lt.s32.totalorder %s315, 1
        %s321 = scalar_select %p320, %s315, 1
        %s322 = smul.addr %s319, 2
        %s323 = sadd.s32 %s321, %s322
        %s324 = smul.addr %s317, 4
        %s325 = sadd.s32 %s323, %s324
        %s326 = smul.addr %s325, 4
        %s327 = scalar_lea.vmem %s4, %s326
        %p328 = pneg %p162
        %p329 = pneg %p159
        %p330 = pneg %p192
        %p331 = pneg %p189
        %s332 = sand.u32 %s179, 1
        %s333 = scalar_lea.sflag [#allocation6], %s332
        %s334 = sand.u32 %s179, 1
        %s335 = smul.addr %s334, 16
        %s336 = scalar_lea.vmem [#allocation5], %s335
        %s337 = smul.u32 32, %s34
        %p338 = scmp.lt.s32.totalorder %s31, 1
        %s339 = scalar_select %p338, %s31, 1
        %p340 = scmp.lt.s32.totalorder %s32, 1
        %s341 = scalar_select %p340, %s32, 1
        %p342 = scmp.lt.s32.totalorder %s337, 31
        %s343 = scalar_select %p342, %s337, 31
        %s344 = smul.addr %s341, 32
        %s345 = sadd.s32 %s343, %s344
        %s346 = smul.addr %s339, 64
        %s347 = sadd.s32 %s345, %s346
        %s348 = smul.addr %s347, 8
        %s349 = scalar_lea.vmem %s1, %s348
        %s350 = smul.u32 32, %s34
        %s351 = smul.u32 2, %s34
        %p352 = scmp.lt.s32.totalorder %s31, 1
        %s353 = scalar_select %p352, %s31, 1
        %p354 = scmp.lt.s32.totalorder %s32, 1
        %s355 = scalar_select %p354, %s32, 1
        %p356 = scmp.lt.s32.totalorder %s351, 1
        %s357 = scalar_select %p356, %s351, 1
        %s358 = smul.addr %s355, 2
        %s359 = sadd.s32 %s357, %s358
        %s360 = smul.addr %s353, 4
        %s361 = sadd.s32 %s359, %s360
        %s362 = smul.addr %s361, 4
        %s363 = scalar_lea.vmem %s2, %s362
        %s364 = smul.u32 2, %s34
        %s365 = smul.u32 2, %s33
        %p366 = scmp.lt.s32.totalorder %s365, 1
        %s367 = scalar_select %p366, %s365, 1
        %s368 = smul.addr %s367, 8
        %s369 = scalar_lea.vmem %s3, %s368
        %s370 = smul.u32 2, %s33
        %s371 = smul.u32 2, %s33
        %p372 = scmp.lt.s32.totalorder %s31, 1
        %s373 = scalar_select %p372, %s31, 1
        %p374 = scmp.lt.s32.totalorder %s32, 1
        %s375 = scalar_select %p374, %s32, 1
        %p376 = scmp.lt.s32.totalorder %s371, 1
        %s377 = scalar_select %p376, %s371, 1
        %s378 = smul.addr %s375, 2
        %s379 = sadd.s32 %s377, %s378
        %s380 = smul.addr %s373, 4
        %s381 = sadd.s32 %s379, %s380
        %s382 = smul.addr %s381, 4
        %s383 = scalar_lea.vmem %s4, %s382
        %s384 = smul.u32 2, %s33
        %s385 = smul.u32 2, %s33
        %p386 = scmp.eq.s32.totalorder %s34, 0
        // Predicated region
        $region37: #{tpu_custom_call.1} parent=35 // pred_check
          %p387 = pneg %p386
        $region38: #{tpu_custom_call.1} parent=35 // pred_check_branch
          %389 = sbr.rel (%p387) target = $region40
        $region39: #{tpu_custom_call.1} parent=35 // pred_region
          %390 = vst [vmem:[#allocation2] sm:$0xff] 0.0
          %391 = vst [vmem:[#allocation2 + $0x8] sm:$0xff] 0.0
        $region40: #{tpu_custom_call.1} parent=35 // pred_fallthru
          _
        %s392 = smul.u32 %s31, 2
        %s393 = sadd.s32 %s392, %s32
        %s394 = sadd.s32 %s393, %s33
        %s395 = sadd.s32 %s394, %s34
        %s396 = sld [smem:[#allocation4 + %s395]]
        %p397 = scmp.ne.s32.totalorder %s396, 0
        // Predicated region
        $region41: #{tpu_custom_call.1} parent=35 // pred_check
          %p398 = pneg %p397
        $region42: #{tpu_custom_call.1} parent=35 // pred_check_branch
          %400 = sbr.rel (%p398) target = $region44
        $region43: #{tpu_custom_call.1} parent=35 // pred_region
          %v401 = vld [vmem:[%s349] sm:$0xff]
          %v402 = vld [vmem:[%s349 + $0x8] sm:$0xff]
          %v403 = vld [vmem:[%s349 + $0x10] sm:$0xff]
          %v404 = vld [vmem:[%s349 + $0x18] sm:$0xff]
          %v405 = vld [vmem:[%s349 + $0x20] sm:$0xff]
          %v406 = vld [vmem:[%s349 + $0x28] sm:$0xff]
          %v407 = vld [vmem:[%s349 + $0x30] sm:$0xff]
          %v408 = vld [vmem:[%s349 + $0x38] sm:$0xff]
          %v409 = vld [vmem:[%s349 + $0x40] sm:$0xff]
          %v410 = vld [vmem:[%s349 + $0x48] sm:$0xff]
          %v411 = vld [vmem:[%s349 + $0x50] sm:$0xff]
          %v412 = vld [vmem:[%s349 + $0x58] sm:$0xff]
          %v413 = vld [vmem:[%s349 + $0x60] sm:$0xff]
          %v414 = vld [vmem:[%s349 + $0x68] sm:$0xff]
          %v415 = vld [vmem:[%s349 + $0x70] sm:$0xff]
          %v416 = vld [vmem:[%s349 + $0x78] sm:$0xff]
          %v417 = vld [vmem:[%s349 + $0x80] sm:$0xff]
          %v418 = vld [vmem:[%s349 + $0x88] sm:$0xff]
          %v419 = vld [vmem:[%s349 + $0x90] sm:$0xff]
          %v420 = vld [vmem:[%s349 + $0x98] sm:$0xff]
          %v421 = vld [vmem:[%s349 + $0xa0] sm:$0xff]
          %v422 = vld [vmem:[%s349 + $0xa8] sm:$0xff]
          %v423 = vld [vmem:[%s349 + $0xb0] sm:$0xff]
          %v424 = vld [vmem:[%s349 + $0xb8] sm:$0xff]
          %v425 = vld [vmem:[%s349 + $0xc0] sm:$0xff]
          %v426 = vld [vmem:[%s349 + $0xc8] sm:$0xff]
          %v427 = vld [vmem:[%s349 + $0xd0] sm:$0xff]
          %v428 = vld [vmem:[%s349 + $0xd8] sm:$0xff]
          %v429 = vld [vmem:[%s349 + $0xe0] sm:$0xff]
          %v430 = vld [vmem:[%s349 + $0xe8] sm:$0xff]
          %v431 = vld [vmem:[%s349 + $0xf0] sm:$0xff]
          %v432 = vld [vmem:[%s349 + $0xf8] sm:$0xff]
          %v433 = vld [vmem:[%s369] ss:$8 sm:$0x3]
          %s434 = scalar_lea.vmem %s369, 1
          %v435 = vld [vmem:[%s434] ss:$8 sm:$0x3]
          %v437 = vlaneseq
          %v438 = vshrl.u32 %v437, 7
          %v439 = vsub.s32 0, %v438
          %v440 = vrot.slane %v433, %v439
          %v441 = vlaneseq
          %v442 = vshrl.u32 %v441, 7
          %v443 = vsub.s32 1, %v442
          %v444 = vrot.slane %v433, %v443
          %448 = vset.pattern.permute.xlu0 0
          %449 = vperm.xlu0 %448, %v401
          %v450 = vpop.permute.xlu0 %449
          %453 = vset.pattern.permute.xlu0 0
          %454 = vperm.xlu0 %453, %v402
          %v455 = vpop.permute.xlu0 %454
          %458 = vset.pattern.permute.xlu0 0
          %459 = vperm.xlu0 %458, %v403
          %v460 = vpop.permute.xlu0 %459
          %463 = vset.pattern.permute.xlu0 0
          %464 = vperm.xlu0 %463, %v404
          %v465 = vpop.permute.xlu0 %464
          %468 = vset.pattern.permute.xlu0 0
          %469 = vperm.xlu0 %468, %v405
          %v470 = vpop.permute.xlu0 %469
          %473 = vset.pattern.permute.xlu0 0
          %474 = vperm.xlu0 %473, %v406
          %v475 = vpop.permute.xlu0 %474
          %478 = vset.pattern.permute.xlu0 0
          %479 = vperm.xlu0 %478, %v407
          %v480 = vpop.permute.xlu0 %479
          %483 = vset.pattern.permute.xlu0 0
          %484 = vperm.xlu0 %483, %v408
          %v485 = vpop.permute.xlu0 %484
          %488 = vset.pattern.permute.xlu0 0
          %489 = vperm.xlu0 %488, %v409
          %v490 = vpop.permute.xlu0 %489
          %493 = vset.pattern.permute.xlu0 0
          %494 = vperm.xlu0 %493, %v410
          %v495 = vpop.permute.xlu0 %494
          %498 = vset.pattern.permute.xlu0 0
          %499 = vperm.xlu0 %498, %v411
          %v500 = vpop.permute.xlu0 %499
          %503 = vset.pattern.permute.xlu0 0
          %504 = vperm.xlu0 %503, %v412
          %v505 = vpop.permute.xlu0 %504
          %508 = vset.pattern.permute.xlu0 0
          %509 = vperm.xlu0 %508, %v413
          %v510 = vpop.permute.xlu0 %509
          %513 = vset.pattern.permute.xlu0 0
          %514 = vperm.xlu0 %513, %v414
          %v515 = vpop.permute.xlu0 %514
          %518 = vset.pattern.permute.xlu0 0
          %519 = vperm.xlu0 %518, %v415
          %v520 = vpop.permute.xlu0 %519
          %523 = vset.pattern.permute.xlu0 0
          %524 = vperm.xlu0 %523, %v416
          %v525 = vpop.permute.xlu0 %524
          %528 = vset.pattern.permute.xlu0 0
          %529 = vperm.xlu0 %528, %v417
          %v530 = vpop.permute.xlu0 %529
          %533 = vset.pattern.permute.xlu0 0
          %534 = vperm.xlu0 %533, %v418
          %v535 = vpop.permute.xlu0 %534
          %538 = vset.pattern.permute.xlu0 0
          %539 = vperm.xlu0 %538, %v419
          %v540 = vpop.permute.xlu0 %539
          %543 = vset.pattern.permute.xlu0 0
          %544 = vperm.xlu0 %543, %v420
          %v545 = vpop.permute.xlu0 %544
          %548 = vset.pattern.permute.xlu0 0
          %549 = vperm.xlu0 %548, %v421
          %v550 = vpop.permute.xlu0 %549
          %553 = vset.pattern.permute.xlu0 0
          %554 = vperm.xlu0 %553, %v422
          %v555 = vpop.permute.xlu0 %554
          %558 = vset.pattern.permute.xlu0 0
          %559 = vperm.xlu0 %558, %v423
          %v560 = vpop.permute.xlu0 %559
          %563 = vset.pattern.permute.xlu0 0
          %564 = vperm.xlu0 %563, %v424
          %v565 = vpop.permute.xlu0 %564
          %568 = vset.pattern.permute.xlu0 0
          %569 = vperm.xlu0 %568, %v425
          %v570 = vpop.permute.xlu0 %569
          %573 = vset.pattern.permute.xlu0 0
          %574 = vperm.xlu0 %573, %v426
          %v575 = vpop.permute.xlu0 %574
          %578 = vset.pattern.permute.xlu0 0
          %579 = vperm.xlu0 %578, %v427
          %v580 = vpop.permute.xlu0 %579
          %583 = vset.pattern.permute.xlu0 0
          %584 = vperm.xlu0 %583, %v428
          %v585 = vpop.permute.xlu0 %584
          %588 = vset.pattern.permute.xlu0 0
          %589 = vperm.xlu0 %588, %v429
          %v590 = vpop.permute.xlu0 %589
          %593 = vset.pattern.permute.xlu0 0
          %594 = vperm.xlu0 %593, %v430
          %v595 = vpop.permute.xlu0 %594
          %598 = vset.pattern.permute.xlu0 0
          %599 = vperm.xlu0 %598, %v431
          %v600 = vpop.permute.xlu0 %599
          %603 = vset.pattern.permute.xlu0 0
          %604 = vperm.xlu0 %603, %v432
          %v605 = vpop.permute.xlu0 %604
          %v607 = vsub.f32 %v440, %v450
          %v608 = vsub.f32 %v444, %v450
          %v609 = vsub.f32 %v440, %v455
          %v610 = vsub.f32 %v444, %v455
          %v611 = vsub.f32 %v440, %v460
          %v612 = vsub.f32 %v444, %v460
          %v613 = vsub.f32 %v440, %v465
          %v614 = vsub.f32 %v444, %v465
          %v615 = vsub.f32 %v440, %v470
          %v616 = vsub.f32 %v444, %v470
          %v617 = vsub.f32 %v440, %v475
          %v618 = vsub.f32 %v444, %v475
          %v619 = vsub.f32 %v440, %v480
          %v620 = vsub.f32 %v444, %v480
          %v621 = vsub.f32 %v440, %v485
          %v622 = vsub.f32 %v444, %v485
          %v623 = vsub.f32 %v440, %v490
          %v624 = vsub.f32 %v444, %v490
          %v625 = vsub.f32 %v440, %v495
          %v626 = vsub.f32 %v444, %v495
          %v627 = vsub.f32 %v440, %v500
          %v628 = vsub.f32 %v444, %v500
          %v629 = vsub.f32 %v440, %v505
          %v630 = vsub.f32 %v444, %v505
          %v631 = vsub.f32 %v440, %v510
          %v632 = vsub.f32 %v444, %v510
          %v633 = vsub.f32 %v440, %v515
          %v634 = vsub.f32 %v444, %v515
          %v635 = vsub.f32 %v440, %v520
          %v636 = vsub.f32 %v444, %v520
          %v637 = vsub.f32 %v440, %v525
          %v638 = vsub.f32 %v444, %v525
          %v639 = vsub.f32 %v440, %v530
          %v640 = vsub.f32 %v444, %v530
          %v641 = vsub.f32 %v440, %v535
          %v642 = vsub.f32 %v444, %v535
          %v643 = vsub.f32 %v440, %v540
          %v644 = vsub.f32 %v444, %v540
          %v645 = vsub.f32 %v440, %v545
          %v646 = vsub.f32 %v444, %v545
          %v647 = vsub.f32 %v440, %v550
          %v648 = vsub.f32 %v444, %v550
          %v649 = vsub.f32 %v440, %v555
          %v650 = vsub.f32 %v444, %v555
          %v651 = vsub.f32 %v440, %v560
          %v652 = vsub.f32 %v444, %v560
          %v653 = vsub.f32 %v440, %v565
          %v654 = vsub.f32 %v444, %v565
          %v655 = vsub.f32 %v440, %v570
          %v656 = vsub.f32 %v444, %v570
          %v657 = vsub.f32 %v440, %v575
          %v658 = vsub.f32 %v444, %v575
          %v659 = vsub.f32 %v440, %v580
          %v660 = vsub.f32 %v444, %v580
          %v661 = vsub.f32 %v440, %v585
          %v662 = vsub.f32 %v444, %v585
          %v663 = vsub.f32 %v440, %v590
          %v664 = vsub.f32 %v444, %v590
          %v665 = vsub.f32 %v440, %v595
          %v666 = vsub.f32 %v444, %v595
          %v667 = vsub.f32 %v440, %v600
          %v668 = vsub.f32 %v444, %v600
          %v669 = vsub.f32 %v440, %v605
          %v670 = vsub.f32 %v444, %v605
          %v672 = vlaneseq
          %v673 = vshrl.u32 %v672, 7
          %v674 = vsub.s32 0, %v673
          %v675 = vrot.slane %v435, %v674
          %v676 = vlaneseq
          %v677 = vshrl.u32 %v676, 7
          %v678 = vsub.s32 1, %v677
          %v679 = vrot.slane %v435, %v678
          %682 = vset.pattern.permute.xlu0 1
          %683 = vperm.xlu0 %682, %v401
          %v684 = vpop.permute.xlu0 %683
          %686 = vset.pattern.permute.xlu0 1
          %687 = vperm.xlu0 %686, %v402
          %v688 = vpop.permute.xlu0 %687
          %690 = vset.pattern.permute.xlu0 1
          %691 = vperm.xlu0 %690, %v403
          %v692 = vpop.permute.xlu0 %691
          %694 = vset.pattern.permute.xlu0 1
          %695 = vperm.xlu0 %694, %v404
          %v696 = vpop.permute.xlu0 %695
          %698 = vset.pattern.permute.xlu0 1
          %699 = vperm.xlu0 %698, %v405
          %v700 = vpop.permute.xlu0 %699
          %702 = vset.pattern.permute.xlu0 1
          %703 = vperm.xlu0 %702, %v406
          %v704 = vpop.permute.xlu0 %703
          %706 = vset.pattern.permute.xlu0 1
          %707 = vperm.xlu0 %706, %v407
          %v708 = vpop.permute.xlu0 %707
          %710 = vset.pattern.permute.xlu0 1
          %711 = vperm.xlu0 %710, %v408
          %v712 = vpop.permute.xlu0 %711
          %714 = vset.pattern.permute.xlu0 1
          %715 = vperm.xlu0 %714, %v409
          %v716 = vpop.permute.xlu0 %715
          %718 = vset.pattern.permute.xlu0 1
          %719 = vperm.xlu0 %718, %v410
          %v720 = vpop.permute.xlu0 %719
          %722 = vset.pattern.permute.xlu0 1
          %723 = vperm.xlu0 %722, %v411
          %v724 = vpop.permute.xlu0 %723
          %726 = vset.pattern.permute.xlu0 1
          %727 = vperm.xlu0 %726, %v412
          %v728 = vpop.permute.xlu0 %727
          %730 = vset.pattern.permute.xlu0 1
          %731 = vperm.xlu0 %730, %v413
          %v732 = vpop.permute.xlu0 %731
          %734 = vset.pattern.permute.xlu0 1
          %735 = vperm.xlu0 %734, %v414
          %v736 = vpop.permute.xlu0 %735
          %738 = vset.pattern.permute.xlu0 1
          %739 = vperm.xlu0 %738, %v415
          %v740 = vpop.permute.xlu0 %739
          %742 = vset.pattern.permute.xlu0 1
          %743 = vperm.xlu0 %742, %v416
          %v744 = vpop.permute.xlu0 %743
          %746 = vset.pattern.permute.xlu0 1
          %747 = vperm.xlu0 %746, %v417
          %v748 = vpop.permute.xlu0 %747
          %750 = vset.pattern.permute.xlu0 1
          %751 = vperm.xlu0 %750, %v418
          %v752 = vpop.permute.xlu0 %751
          %754 = vset.pattern.permute.xlu0 1
          %755 = vperm.xlu0 %754, %v419
          %v756 = vpop.permute.xlu0 %755
          %758 = vset.pattern.permute.xlu0 1
          %759 = vperm.xlu0 %758, %v420
          %v760 = vpop.permute.xlu0 %759
          %762 = vset.pattern.permute.xlu0 1
          %763 = vperm.xlu0 %762, %v421
          %v764 = vpop.permute.xlu0 %763
          %766 = vset.pattern.permute.xlu0 1
          %767 = vperm.xlu0 %766, %v422
          %v768 = vpop.permute.xlu0 %767
          %770 = vset.pattern.permute.xlu0 1
          %771 = vperm.xlu0 %770, %v423
          %v772 = vpop.permute.xlu0 %771
          %774 = vset.pattern.permute.xlu0 1
          %775 = vperm.xlu0 %774, %v424
          %v776 = vpop.permute.xlu0 %775
          %778 = vset.pattern.permute.xlu0 1
          %779 = vperm.xlu0 %778, %v425
          %v780 = vpop.permute.xlu0 %779
          %782 = vset.pattern.permute.xlu0 1
          %783 = vperm.xlu0 %782, %v426
          %v784 = vpop.permute.xlu0 %783
          %786 = vset.pattern.permute.xlu0 1
          %787 = vperm.xlu0 %786, %v427
          %v788 = vpop.permute.xlu0 %787
          %790 = vset.pattern.permute.xlu0 1
          %791 = vperm.xlu0 %790, %v428
          %v792 = vpop.permute.xlu0 %791
          %794 = vset.pattern.permute.xlu0 1
          %795 = vperm.xlu0 %794, %v429
          %v796 = vpop.permute.xlu0 %795
          %798 = vset.pattern.permute.xlu0 1
          %799 = vperm.xlu0 %798, %v430
          %v800 = vpop.permute.xlu0 %799
          %802 = vset.pattern.permute.xlu0 1
          %803 = vperm.xlu0 %802, %v431
          %v804 = vpop.permute.xlu0 %803
          %806 = vset.pattern.permute.xlu0 1
          %807 = vperm.xlu0 %806, %v432
          %v808 = vpop.permute.xlu0 %807
          %v810 = vsub.f32 %v675, %v684
          %v811 = vsub.f32 %v679, %v684
          %v812 = vsub.f32 %v675, %v688
          %v813 = vsub.f32 %v679, %v688
          %v814 = vsub.f32 %v675, %v692
          %v815 = vsub.f32 %v679, %v692
          %v816 = vsub.f32 %v675, %v696
          %v817 = vsub.f32 %v679, %v696
          %v818 = vsub.f32 %v675, %v700
          %v819 = vsub.f32 %v679, %v700
          %v820 = vsub.f32 %v675, %v704
          %v821 = vsub.f32 %v679, %v704
          %v822 = vsub.f32 %v675, %v708
          %v823 = vsub.f32 %v679, %v708
          %v824 = vsub.f32 %v675, %v712
          %v825 = vsub.f32 %v679, %v712
          %v826 = vsub.f32 %v675, %v716
          %v827 = vsub.f32 %v679, %v716
          %v828 = vsub.f32 %v675, %v720
          %v829 = vsub.f32 %v679, %v720
          %v830 = vsub.f32 %v675, %v724
          %v831 = vsub.f32 %v679, %v724
          %v832 = vsub.f32 %v675, %v728
          %v833 = vsub.f32 %v679, %v728
          %v834 = vsub.f32 %v675, %v732
          %v835 = vsub.f32 %v679, %v732
          %v836 = vsub.f32 %v675, %v736
          %v837 = vsub.f32 %v679, %v736
          %v838 = vsub.f32 %v675, %v740
          %v839 = vsub.f32 %v679, %v740
          %v840 = vsub.f32 %v675, %v744
          %v841 = vsub.f32 %v679, %v744
          %v842 = vsub.f32 %v675, %v748
          %v843 = vsub.f32 %v679, %v748
          %v844 = vsub.f32 %v675, %v752
          %v845 = vsub.f32 %v679, %v752
          %v846 = vsub.f32 %v675, %v756
          %v847 = vsub.f32 %v679, %v756
          %v848 = vsub.f32 %v675, %v760
          %v849 = vsub.f32 %v679, %v760
          %v850 = vsub.f32 %v675, %v764
          %v851 = vsub.f32 %v679, %v764
          %v852 = vsub.f32 %v675, %v768
          %v853 = vsub.f32 %v679, %v768
          %v854 = vsub.f32 %v675, %v772
          %v855 = vsub.f32 %v679, %v772
          %v856 = vsub.f32 %v675, %v776
          %v857 = vsub.f32 %v679, %v776
          %v858 = vsub.f32 %v675, %v780
          %v859 = vsub.f32 %v679, %v780
          %v860 = vsub.f32 %v675, %v784
          %v861 = vsub.f32 %v679, %v784
          %v862 = vsub.f32 %v675, %v788
          %v863 = vsub.f32 %v679, %v788
          %v864 = vsub.f32 %v675, %v792
          %v865 = vsub.f32 %v679, %v792
          %v866 = vsub.f32 %v675, %v796
          %v867 = vsub.f32 %v679, %v796
          %v868 = vsub.f32 %v675, %v800
          %v869 = vsub.f32 %v679, %v800
          %v870 = vsub.f32 %v675, %v804
          %v871 = vsub.f32 %v679, %v804
          %v872 = vsub.f32 %v675, %v808
          %v873 = vsub.f32 %v679, %v808
          %v874 = vmul.f32 %v607, %v607
          %v875 = vmul.f32 %v608, %v608
          %v876 = vmul.f32 %v609, %v609
          %v877 = vmul.f32 %v610, %v610
          %v878 = vmul.f32 %v611, %v611
          %v879 = vmul.f32 %v612, %v612
          %v880 = vmul.f32 %v613, %v613
          %v881 = vmul.f32 %v614, %v614
          %v882 = vmul.f32 %v615, %v615
          %v883 = vmul.f32 %v616, %v616
          %v884 = vmul.f32 %v617, %v617
          %v885 = vmul.f32 %v618, %v618
          %v886 = vmul.f32 %v619, %v619
          %v887 = vmul.f32 %v620, %v620
          %v888 = vmul.f32 %v621, %v621
          %v889 = vmul.f32 %v622, %v622
          %v890 = vmul.f32 %v623, %v623
          %v891 = vmul.f32 %v624, %v624
          %v892 = vmul.f32 %v625, %v625
          %v893 = vmul.f32 %v626, %v626
          %v894 = vmul.f32 %v627, %v627
          %v895 = vmul.f32 %v628, %v628
          %v896 = vmul.f32 %v629, %v629
          %v897 = vmul.f32 %v630, %v630
          %v898 = vmul.f32 %v631, %v631
          %v899 = vmul.f32 %v632, %v632
          %v900 = vmul.f32 %v633, %v633
          %v901 = vmul.f32 %v634, %v634
          %v902 = vmul.f32 %v635, %v635
          %v903 = vmul.f32 %v636, %v636
          %v904 = vmul.f32 %v637, %v637
          %v905 = vmul.f32 %v638, %v638
          %v906 = vmul.f32 %v639, %v639
          %v907 = vmul.f32 %v640, %v640
          %v908 = vmul.f32 %v641, %v641
          %v909 = vmul.f32 %v642, %v642
          %v910 = vmul.f32 %v643, %v643
          %v911 = vmul.f32 %v644, %v644
          %v912 = vmul.f32 %v645, %v645
          %v913 = vmul.f32 %v646, %v646
          %v914 = vmul.f32 %v647, %v647
          %v915 = vmul.f32 %v648, %v648
          %v916 = vmul.f32 %v649, %v649
          %v917 = vmul.f32 %v650, %v650
          %v918 = vmul.f32 %v651, %v651
          %v919 = vmul.f32 %v652, %v652
          %v920 = vmul.f32 %v653, %v653
          %v921 = vmul.f32 %v654, %v654
          %v922 = vmul.f32 %v655, %v655
          %v923 = vmul.f32 %v656, %v656
          %v924 = vmul.f32 %v657, %v657
          %v925 = vmul.f32 %v658, %v658
          %v926 = vmul.f32 %v659, %v659
          %v927 = vmul.f32 %v660, %v660
          %v928 = vmul.f32 %v661, %v661
          %v929 = vmul.f32 %v662, %v662
          %v930 = vmul.f32 %v663, %v663
          %v931 = vmul.f32 %v664, %v664
          %v932 = vmul.f32 %v665, %v665
          %v933 = vmul.f32 %v666, %v666
          %v934 = vmul.f32 %v667, %v667
          %v935 = vmul.f32 %v668, %v668
          %v936 = vmul.f32 %v669, %v669
          %v937 = vmul.f32 %v670, %v670
          %v938 = vmul.f32 %v810, %v810
          %v939 = vmul.f32 %v811, %v811
          %v940 = vmul.f32 %v812, %v812
          %v941 = vmul.f32 %v813, %v813
          %v942 = vmul.f32 %v814, %v814
          %v943 = vmul.f32 %v815, %v815
          %v944 = vmul.f32 %v816, %v816
          %v945 = vmul.f32 %v817, %v817
          %v946 = vmul.f32 %v818, %v818
          %v947 = vmul.f32 %v819, %v819
          %v948 = vmul.f32 %v820, %v820
          %v949 = vmul.f32 %v821, %v821
          %v950 = vmul.f32 %v822, %v822
          %v951 = vmul.f32 %v823, %v823
          %v952 = vmul.f32 %v824, %v824
          %v953 = vmul.f32 %v825, %v825
          %v954 = vmul.f32 %v826, %v826
          %v955 = vmul.f32 %v827, %v827
          %v956 = vmul.f32 %v828, %v828
          %v957 = vmul.f32 %v829, %v829
          %v958 = vmul.f32 %v830, %v830
          %v959 = vmul.f32 %v831, %v831
          %v960 = vmul.f32 %v832, %v832
          %v961 = vmul.f32 %v833, %v833
          %v962 = vmul.f32 %v834, %v834
          %v963 = vmul.f32 %v835, %v835
          %v964 = vmul.f32 %v836, %v836
          %v965 = vmul.f32 %v837, %v837
          %v966 = vmul.f32 %v838, %v838
          %v967 = vmul.f32 %v839, %v839
          %v968 = vmul.f32 %v840, %v840
          %v969 = vmul.f32 %v841, %v841
          %v970 = vmul.f32 %v842, %v842
          %v971 = vmul.f32 %v843, %v843
          %v972 = vmul.f32 %v844, %v844
          %v973 = vmul.f32 %v845, %v845
          %v974 = vmul.f32 %v846, %v846
          %v975 = vmul.f32 %v847, %v847
          %v976 = vmul.f32 %v848, %v848
          %v977 = vmul.f32 %v849, %v849
          %v978 = vmul.f32 %v850, %v850
          %v979 = vmul.f32 %v851, %v851
          %v980 = vmul.f32 %v852, %v852
          %v981 = vmul.f32 %v853, %v853
          %v982 = vmul.f32 %v854, %v854
          %v983 = vmul.f32 %v855, %v855
          %v984 = vmul.f32 %v856, %v856
          %v985 = vmul.f32 %v857, %v857
          %v986 = vmul.f32 %v858, %v858
          %v987 = vmul.f32 %v859, %v859
          %v988 = vmul.f32 %v860, %v860
          %v989 = vmul.f32 %v861, %v861
          %v990 = vmul.f32 %v862, %v862
          %v991 = vmul.f32 %v863, %v863
          %v992 = vmul.f32 %v864, %v864
          %v993 = vmul.f32 %v865, %v865
          %v994 = vmul.f32 %v866, %v866
          %v995 = vmul.f32 %v867, %v867
          %v996 = vmul.f32 %v868, %v868
          %v997 = vmul.f32 %v869, %v869
          %v998 = vmul.f32 %v870, %v870
          %v999 = vmul.f32 %v871, %v871
          %v1000 = vmul.f32 %v872, %v872
          %v1001 = vmul.f32 %v873, %v873
          %v1002 = vadd.f32 %v874, %v938
          %v1003 = vadd.f32 %v875, %v939
          %v1004 = vadd.f32 %v876, %v940
          %v1005 = vadd.f32 %v877, %v941
          %v1006 = vadd.f32 %v878, %v942
          %v1007 = vadd.f32 %v879, %v943
          %v1008 = vadd.f32 %v880, %v944
          %v1009 = vadd.f32 %v881, %v945
          %v1010 = vadd.f32 %v882, %v946
          %v1011 = vadd.f32 %v883, %v947
          %v1012 = vadd.f32 %v884, %v948
          %v1013 = vadd.f32 %v885, %v949
          %v1014 = vadd.f32 %v886, %v950
          %v1015 = vadd.f32 %v887, %v951
          %v1016 = vadd.f32 %v888, %v952
          %v1017 = vadd.f32 %v889, %v953
          %v1018 = vadd.f32 %v890, %v954
          %v1019 = vadd.f32 %v891, %v955
          %v1020 = vadd.f32 %v892, %v956
          %v1021 = vadd.f32 %v893, %v957
          %v1022 = vadd.f32 %v894, %v958
          %v1023 = vadd.f32 %v895, %v959
          %v1024 = vadd.f32 %v896, %v960
          %v1025 = vadd.f32 %v897, %v961
          %v1026 = vadd.f32 %v898, %v962
          %v1027 = vadd.f32 %v899, %v963
          %v1028 = vadd.f32 %v900, %v964
          %v1029 = vadd.f32 %v901, %v965
          %v1030 = vadd.f32 %v902, %v966
          %v1031 = vadd.f32 %v903, %v967
          %v1032 = vadd.f32 %v904, %v968
          %v1033 = vadd.f32 %v905, %v969
          %v1034 = vadd.f32 %v906, %v970
          %v1035 = vadd.f32 %v907, %v971
          %v1036 = vadd.f32 %v908, %v972
          %v1037 = vadd.f32 %v909, %v973
          %v1038 = vadd.f32 %v910, %v974
          %v1039 = vadd.f32 %v911, %v975
          %v1040 = vadd.f32 %v912, %v976
          %v1041 = vadd.f32 %v913, %v977
          %v1042 = vadd.f32 %v914, %v978
          %v1043 = vadd.f32 %v915, %v979
          %v1044 = vadd.f32 %v916, %v980
          %v1045 = vadd.f32 %v917, %v981
          %v1046 = vadd.f32 %v918, %v982
          %v1047 = vadd.f32 %v919, %v983
          %v1048 = vadd.f32 %v920, %v984
          %v1049 = vadd.f32 %v921, %v985
          %v1050 = vadd.f32 %v922, %v986
          %v1051 = vadd.f32 %v923, %v987
          %v1052 = vadd.f32 %v924, %v988
          %v1053 = vadd.f32 %v925, %v989
          %v1054 = vadd.f32 %v926, %v990
          %v1055 = vadd.f32 %v927, %v991
          %v1056 = vadd.f32 %v928, %v992
          %v1057 = vadd.f32 %v929, %v993
          %v1058 = vadd.f32 %v930, %v994
          %v1059 = vadd.f32 %v931, %v995
          %v1060 = vadd.f32 %v932, %v996
          %v1061 = vadd.f32 %v933, %v997
          %v1062 = vadd.f32 %v934, %v998
          %v1063 = vadd.f32 %v935, %v999
          %v1064 = vadd.f32 %v936, %v1000
          %v1065 = vadd.f32 %v937, %v1001
          %1066 = vset.pattern.permute.xlu0 2
          %1067 = vperm.xlu0 %1066, %v401
          %v1068 = vpop.permute.xlu0 %1067
          %1070 = vset.pattern.permute.xlu0 2
          %1071 = vperm.xlu0 %1070, %v402
          %v1072 = vpop.permute.xlu0 %1071
          %1074 = vset.pattern.permute.xlu0 2
          %1075 = vperm.xlu0 %1074, %v403
          %v1076 = vpop.permute.xlu0 %1075
          %1078 = vset.pattern.permute.xlu0 2
          %1079 = vperm.xlu0 %1078, %v404
          %v1080 = vpop.permute.xlu0 %1079
          %1082 = vset.pattern.permute.xlu0 2
          %1083 = vperm.xlu0 %1082, %v405
          %v1084 = vpop.permute.xlu0 %1083
          %1086 = vset.pattern.permute.xlu0 2
          %1087 = vperm.xlu0 %1086, %v406
          %v1088 = vpop.permute.xlu0 %1087
          %1090 = vset.pattern.permute.xlu0 2
          %1091 = vperm.xlu0 %1090, %v407
          %v1092 = vpop.permute.xlu0 %1091
          %1094 = vset.pattern.permute.xlu0 2
          %1095 = vperm.xlu0 %1094, %v408
          %v1096 = vpop.permute.xlu0 %1095
          %1098 = vset.pattern.permute.xlu0 2
          %1099 = vperm.xlu0 %1098, %v409
          %v1100 = vpop.permute.xlu0 %1099
          %1102 = vset.pattern.permute.xlu0 2
          %1103 = vperm.xlu0 %1102, %v410
          %v1104 = vpop.permute.xlu0 %1103
          %1106 = vset.pattern.permute.xlu0 2
          %1107 = vperm.xlu0 %1106, %v411
          %v1108 = vpop.permute.xlu0 %1107
          %1110 = vset.pattern.permute.xlu0 2
          %1111 = vperm.xlu0 %1110, %v412
          %v1112 = vpop.permute.xlu0 %1111
          %1114 = vset.pattern.permute.xlu0 2
          %1115 = vperm.xlu0 %1114, %v413
          %v1116 = vpop.permute.xlu0 %1115
          %1118 = vset.pattern.permute.xlu0 2
          %1119 = vperm.xlu0 %1118, %v414
          %v1120 = vpop.permute.xlu0 %1119
          %1122 = vset.pattern.permute.xlu0 2
          %1123 = vperm.xlu0 %1122, %v415
          %v1124 = vpop.permute.xlu0 %1123
          %1126 = vset.pattern.permute.xlu0 2
          %1127 = vperm.xlu0 %1126, %v416
          %v1128 = vpop.permute.xlu0 %1127
          %1130 = vset.pattern.permute.xlu0 2
          %1131 = vperm.xlu0 %1130, %v417
          %v1132 = vpop.permute.xlu0 %1131
          %1134 = vset.pattern.permute.xlu0 2
          %1135 = vperm.xlu0 %1134, %v418
          %v1136 = vpop.permute.xlu0 %1135
          %1138 = vset.pattern.permute.xlu0 2
          %1139 = vperm.xlu0 %1138, %v419
          %v1140 = vpop.permute.xlu0 %1139
          %1142 = vset.pattern.permute.xlu0 2
          %1143 = vperm.xlu0 %1142, %v420
          %v1144 = vpop.permute.xlu0 %1143
          %1146 = vset.pattern.permute.xlu0 2
          %1147 = vperm.xlu0 %1146, %v421
          %v1148 = vpop.permute.xlu0 %1147
          %1150 = vset.pattern.permute.xlu0 2
          %1151 = vperm.xlu0 %1150, %v422
          %v1152 = vpop.permute.xlu0 %1151
          %1154 = vset.pattern.permute.xlu0 2
          %1155 = vperm.xlu0 %1154, %v423
          %v1156 = vpop.permute.xlu0 %1155
          %1158 = vset.pattern.permute.xlu0 2
          %1159 = vperm.xlu0 %1158, %v424
          %v1160 = vpop.permute.xlu0 %1159
          %1162 = vset.pattern.permute.xlu0 2
          %1163 = vperm.xlu0 %1162, %v425
          %v1164 = vpop.permute.xlu0 %1163
          %1166 = vset.pattern.permute.xlu0 2
          %1167 = vperm.xlu0 %1166, %v426
          %v1168 = vpop.permute.xlu0 %1167
          %1170 = vset.pattern.permute.xlu0 2
          %1171 = vperm.xlu0 %1170, %v427
          %v1172 = vpop.permute.xlu0 %1171
          %1174 = vset.pattern.permute.xlu0 2
          %1175 = vperm.xlu0 %1174, %v428
          %v1176 = vpop.permute.xlu0 %1175
          %1178 = vset.pattern.permute.xlu0 2
          %1179 = vperm.xlu0 %1178, %v429
          %v1180 = vpop.permute.xlu0 %1179
          %1182 = vset.pattern.permute.xlu0 2
          %1183 = vperm.xlu0 %1182, %v430
          %v1184 = vpop.permute.xlu0 %1183
          %1186 = vset.pattern.permute.xlu0 2
          %1187 = vperm.xlu0 %1186, %v431
          %v1188 = vpop.permute.xlu0 %1187
          %1190 = vset.pattern.permute.xlu0 2
          %1191 = vperm.xlu0 %1190, %v432
          %v1192 = vpop.permute.xlu0 %1191
          %v1194 = vmul.f32 %v1002, %v1068
          %v1195 = vmul.f32 %v1003, %v1068
          %v1196 = vmul.f32 %v1004, %v1072
          %v1197 = vmul.f32 %v1005, %v1072
          %v1198 = vmul.f32 %v1006, %v1076
          %v1199 = vmul.f32 %v1007, %v1076
          %v1200 = vmul.f32 %v1008, %v1080
          %v1201 = vmul.f32 %v1009, %v1080
          %v1202 = vmul.f32 %v1010, %v1084
          %v1203 = vmul.f32 %v1011, %v1084
          %v1204 = vmul.f32 %v1012, %v1088
          %v1205 = vmul.f32 %v1013, %v1088
          %v1206 = vmul.f32 %v1014, %v1092
          %v1207 = vmul.f32 %v1015, %v1092
          %v1208 = vmul.f32 %v1016, %v1096
          %v1209 = vmul.f32 %v1017, %v1096
          %v1210 = vmul.f32 %v1018, %v1100
          %v1211 = vmul.f32 %v1019, %v1100
          %v1212 = vmul.f32 %v1020, %v1104
          %v1213 = vmul.f32 %v1021, %v1104
          %v1214 = vmul.f32 %v1022, %v1108
          %v1215 = vmul.f32 %v1023, %v1108
          %v1216 = vmul.f32 %v1024, %v1112
          %v1217 = vmul.f32 %v1025, %v1112
          %v1218 = vmul.f32 %v1026, %v1116
          %v1219 = vmul.f32 %v1027, %v1116
          %v1220 = vmul.f32 %v1028, %v1120
          %v1221 = vmul.f32 %v1029, %v1120
          %v1222 = vmul.f32 %v1030, %v1124
          %v1223 = vmul.f32 %v1031, %v1124
          %v1224 = vmul.f32 %v1032, %v1128
          %v1225 = vmul.f32 %v1033, %v1128
          %v1226 = vmul.f32 %v1034, %v1132
          %v1227 = vmul.f32 %v1035, %v1132
          %v1228 = vmul.f32 %v1036, %v1136
          %v1229 = vmul.f32 %v1037, %v1136
          %v1230 = vmul.f32 %v1038, %v1140
          %v1231 = vmul.f32 %v1039, %v1140
          %v1232 = vmul.f32 %v1040, %v1144
          %v1233 = vmul.f32 %v1041, %v1144
          %v1234 = vmul.f32 %v1042, %v1148
          %v1235 = vmul.f32 %v1043, %v1148
          %v1236 = vmul.f32 %v1044, %v1152
          %v1237 = vmul.f32 %v1045, %v1152
          %v1238 = vmul.f32 %v1046, %v1156
          %v1239 = vmul.f32 %v1047, %v1156
          %v1240 = vmul.f32 %v1048, %v1160
          %v1241 = vmul.f32 %v1049, %v1160
          %v1242 = vmul.f32 %v1050, %v1164
          %v1243 = vmul.f32 %v1051, %v1164
          %v1244 = vmul.f32 %v1052, %v1168
          %v1245 = vmul.f32 %v1053, %v1168
          %v1246 = vmul.f32 %v1054, %v1172
          %v1247 = vmul.f32 %v1055, %v1172
          %v1248 = vmul.f32 %v1056, %v1176
          %v1249 = vmul.f32 %v1057, %v1176
          %v1250 = vmul.f32 %v1058, %v1180
          %v1251 = vmul.f32 %v1059, %v1180
          %v1252 = vmul.f32 %v1060, %v1184
          %v1253 = vmul.f32 %v1061, %v1184
          %v1254 = vmul.f32 %v1062, %v1188
          %v1255 = vmul.f32 %v1063, %v1188
          %v1256 = vmul.f32 %v1064, %v1192
          %v1257 = vmul.f32 %v1065, %v1192
          %1258 = vset.pattern.permute.xlu0 3
          %1259 = vperm.xlu0 %1258, %v401
          %v1260 = vpop.permute.xlu0 %1259
          %1262 = vset.pattern.permute.xlu0 3
          %1263 = vperm.xlu0 %1262, %v402
          %v1264 = vpop.permute.xlu0 %1263
          %1266 = vset.pattern.permute.xlu0 3
          %1267 = vperm.xlu0 %1266, %v403
          %v1268 = vpop.permute.xlu0 %1267
          %1270 = vset.pattern.permute.xlu0 3
          %1271 = vperm.xlu0 %1270, %v404
          %v1272 = vpop.permute.xlu0 %1271
          %1274 = vset.pattern.permute.xlu0 3
          %1275 = vperm.xlu0 %1274, %v405
          %v1276 = vpop.permute.xlu0 %1275
          %1278 = vset.pattern.permute.xlu0 3
          %1279 = vperm.xlu0 %1278, %v406
          %v1280 = vpop.permute.xlu0 %1279
          %1282 = vset.pattern.permute.xlu0 3
          %1283 = vperm.xlu0 %1282, %v407
          %v1284 = vpop.permute.xlu0 %1283
          %1286 = vset.pattern.permute.xlu0 3
          %1287 = vperm.xlu0 %1286, %v408
          %v1288 = vpop.permute.xlu0 %1287
          %1290 = vset.pattern.permute.xlu0 3
          %1291 = vperm.xlu0 %1290, %v409
          %v1292 = vpop.permute.xlu0 %1291
          %1294 = vset.pattern.permute.xlu0 3
          %1295 = vperm.xlu0 %1294, %v410
          %v1296 = vpop.permute.xlu0 %1295
          %1298 = vset.pattern.permute.xlu0 3
          %1299 = vperm.xlu0 %1298, %v411
          %v1300 = vpop.permute.xlu0 %1299
          %1302 = vset.pattern.permute.xlu0 3
          %1303 = vperm.xlu0 %1302, %v412
          %v1304 = vpop.permute.xlu0 %1303
          %1306 = vset.pattern.permute.xlu0 3
          %1307 = vperm.xlu0 %1306, %v413
          %v1308 = vpop.permute.xlu0 %1307
          %1310 = vset.pattern.permute.xlu0 3
          %1311 = vperm.xlu0 %1310, %v414
          %v1312 = vpop.permute.xlu0 %1311
          %1314 = vset.pattern.permute.xlu0 3
          %1315 = vperm.xlu0 %1314, %v415
          %v1316 = vpop.permute.xlu0 %1315
          %1318 = vset.pattern.permute.xlu0 3
          %1319 = vperm.xlu0 %1318, %v416
          %v1320 = vpop.permute.xlu0 %1319
          %1322 = vset.pattern.permute.xlu0 3
          %1323 = vperm.xlu0 %1322, %v417
          %v1324 = vpop.permute.xlu0 %1323
          %1326 = vset.pattern.permute.xlu0 3
          %1327 = vperm.xlu0 %1326, %v418
          %v1328 = vpop.permute.xlu0 %1327
          %1330 = vset.pattern.permute.xlu0 3
          %1331 = vperm.xlu0 %1330, %v419
          %v1332 = vpop.permute.xlu0 %1331
          %1334 = vset.pattern.permute.xlu0 3
          %1335 = vperm.xlu0 %1334, %v420
          %v1336 = vpop.permute.xlu0 %1335
          %1338 = vset.pattern.permute.xlu0 3
          %1339 = vperm.xlu0 %1338, %v421
          %v1340 = vpop.permute.xlu0 %1339
          %1342 = vset.pattern.permute.xlu0 3
          %1343 = vperm.xlu0 %1342, %v422
          %v1344 = vpop.permute.xlu0 %1343
          %1346 = vset.pattern.permute.xlu0 3
          %1347 = vperm.xlu0 %1346, %v423
          %v1348 = vpop.permute.xlu0 %1347
          %1350 = vset.pattern.permute.xlu0 3
          %1351 = vperm.xlu0 %1350, %v424
          %v1352 = vpop.permute.xlu0 %1351
          %1354 = vset.pattern.permute.xlu0 3
          %1355 = vperm.xlu0 %1354, %v425
          %v1356 = vpop.permute.xlu0 %1355
          %1358 = vset.pattern.permute.xlu0 3
          %1359 = vperm.xlu0 %1358, %v426
          %v1360 = vpop.permute.xlu0 %1359
          %1362 = vset.pattern.permute.xlu0 3
          %1363 = vperm.xlu0 %1362, %v427
          %v1364 = vpop.permute.xlu0 %1363
          %1366 = vset.pattern.permute.xlu0 3
          %1367 = vperm.xlu0 %1366, %v428
          %v1368 = vpop.permute.xlu0 %1367
          %1370 = vset.pattern.permute.xlu0 3
          %1371 = vperm.xlu0 %1370, %v429
          %v1372 = vpop.permute.xlu0 %1371
          %1374 = vset.pattern.permute.xlu0 3
          %1375 = vperm.xlu0 %1374, %v430
          %v1376 = vpop.permute.xlu0 %1375
          %1378 = vset.pattern.permute.xlu0 3
          %1379 = vperm.xlu0 %1378, %v431
          %v1380 = vpop.permute.xlu0 %1379
          %1382 = vset.pattern.permute.xlu0 3
          %1383 = vperm.xlu0 %1382, %v432
          %v1384 = vpop.permute.xlu0 %1383
          %v1386 = vadd.f32 %v1194, %v1260
          %v1387 = vadd.f32 %v1195, %v1260
          %v1388 = vadd.f32 %v1196, %v1264
          %v1389 = vadd.f32 %v1197, %v1264
          %v1390 = vadd.f32 %v1198, %v1268
          %v1391 = vadd.f32 %v1199, %v1268
          %v1392 = vadd.f32 %v1200, %v1272
          %v1393 = vadd.f32 %v1201, %v1272
          %v1394 = vadd.f32 %v1202, %v1276
          %v1395 = vadd.f32 %v1203, %v1276
          %v1396 = vadd.f32 %v1204, %v1280
          %v1397 = vadd.f32 %v1205, %v1280
          %v1398 = vadd.f32 %v1206, %v1284
          %v1399 = vadd.f32 %v1207, %v1284
          %v1400 = vadd.f32 %v1208, %v1288
          %v1401 = vadd.f32 %v1209, %v1288
          %v1402 = vadd.f32 %v1210, %v1292
          %v1403 = vadd.f32 %v1211, %v1292
          %v1404 = vadd.f32 %v1212, %v1296
          %v1405 = vadd.f32 %v1213, %v1296
          %v1406 = vadd.f32 %v1214, %v1300
          %v1407 = vadd.f32 %v1215, %v1300
          %v1408 = vadd.f32 %v1216, %v1304
          %v1409 = vadd.f32 %v1217, %v1304
          %v1410 = vadd.f32 %v1218, %v1308
          %v1411 = vadd.f32 %v1219, %v1308
          %v1412 = vadd.f32 %v1220, %v1312
          %v1413 = vadd.f32 %v1221, %v1312
          %v1414 = vadd.f32 %v1222, %v1316
          %v1415 = vadd.f32 %v1223, %v1316
          %v1416 = vadd.f32 %v1224, %v1320
          %v1417 = vadd.f32 %v1225, %v1320
          %v1418 = vadd.f32 %v1226, %v1324
          %v1419 = vadd.f32 %v1227, %v1324
          %v1420 = vadd.f32 %v1228, %v1328
          %v1421 = vadd.f32 %v1229, %v1328
          %v1422 = vadd.f32 %v1230, %v1332
          %v1423 = vadd.f32 %v1231, %v1332
          %v1424 = vadd.f32 %v1232, %v1336
          %v1425 = vadd.f32 %v1233, %v1336
          %v1426 = vadd.f32 %v1234, %v1340
          %v1427 = vadd.f32 %v1235, %v1340
          %v1428 = vadd.f32 %v1236, %v1344
          %v1429 = vadd.f32 %v1237, %v1344
          %v1430 = vadd.f32 %v1238, %v1348
          %v1431 = vadd.f32 %v1239, %v1348
          %v1432 = vadd.f32 %v1240, %v1352
          %v1433 = vadd.f32 %v1241, %v1352
          %v1434 = vadd.f32 %v1242, %v1356
          %v1435 = vadd.f32 %v1243, %v1356
          %v1436 = vadd.f32 %v1244, %v1360
          %v1437 = vadd.f32 %v1245, %v1360
          %v1438 = vadd.f32 %v1246, %v1364
          %v1439 = vadd.f32 %v1247, %v1364
          %v1440 = vadd.f32 %v1248, %v1368
          %v1441 = vadd.f32 %v1249, %v1368
          %v1442 = vadd.f32 %v1250, %v1372
          %v1443 = vadd.f32 %v1251, %v1372
          %v1444 = vadd.f32 %v1252, %v1376
          %v1445 = vadd.f32 %v1253, %v1376
          %v1446 = vadd.f32 %v1254, %v1380
          %v1447 = vadd.f32 %v1255, %v1380
          %v1448 = vadd.f32 %v1256, %v1384
          %v1449 = vadd.f32 %v1257, %v1384
          %v1450 = vpack.c.bf16 %v1388, %v1386
          %v1451 = vpack.c.bf16 %v1389, %v1387
          %v1452 = vpack.c.bf16 %v1392, %v1390
          %v1453 = vpack.c.bf16 %v1393, %v1391
          %v1454 = vpack.c.bf16 %v1396, %v1394
          %v1455 = vpack.c.bf16 %v1397, %v1395
          %v1456 = vpack.c.bf16 %v1400, %v1398
          %v1457 = vpack.c.bf16 %v1401, %v1399
          %v1458 = vpack.c.bf16 %v1404, %v1402
          %v1459 = vpack.c.bf16 %v1405, %v1403
          %v1460 = vpack.c.bf16 %v1408, %v1406
          %v1461 = vpack.c.bf16 %v1409, %v1407
          %v1462 = vpack.c.bf16 %v1412, %v1410
          %v1463 = vpack.c.bf16 %v1413, %v1411
          %v1464 = vpack.c.bf16 %v1416, %v1414
          %v1465 = vpack.c.bf16 %v1417, %v1415
          %v1466 = vpack.c.bf16 %v1420, %v1418
          %v1467 = vpack.c.bf16 %v1421, %v1419
          %v1468 = vpack.c.bf16 %v1424, %v1422
          %v1469 = vpack.c.bf16 %v1425, %v1423
          %v1470 = vpack.c.bf16 %v1428, %v1426
          %v1471 = vpack.c.bf16 %v1429, %v1427
          %v1472 = vpack.c.bf16 %v1432, %v1430
          %v1473 = vpack.c.bf16 %v1433, %v1431
          %v1474 = vpack.c.bf16 %v1436, %v1434
          %v1475 = vpack.c.bf16 %v1437, %v1435
          %v1476 = vpack.c.bf16 %v1440, %v1438
          %v1477 = vpack.c.bf16 %v1441, %v1439
          %v1478 = vpack.c.bf16 %v1444, %v1442
          %v1479 = vpack.c.bf16 %v1445, %v1443
          %v1480 = vpack.c.bf16 %v1448, %v1446
          %v1481 = vpack.c.bf16 %v1449, %v1447
          %v1483 = vmul.bf16 %v1450, 1069105081
          %v1484 = vpow.bf16.pop %v1483
          %v1486 = vmul.bf16 %v1451, 1069105081
          %v1487 = vpow.bf16.pop %v1486
          %v1489 = vmul.bf16 %v1452, 1069105081
          %v1490 = vpow.bf16.pop %v1489
          %v1492 = vmul.bf16 %v1453, 1069105081
          %v1493 = vpow.bf16.pop %v1492
          %v1495 = vmul.bf16 %v1454, 1069105081
          %v1496 = vpow.bf16.pop %v1495
          %v1498 = vmul.bf16 %v1455, 1069105081
          %v1499 = vpow.bf16.pop %v1498
          %v1501 = vmul.bf16 %v1456, 1069105081
          %v1502 = vpow.bf16.pop %v1501
          %v1504 = vmul.bf16 %v1457, 1069105081
          %v1505 = vpow.bf16.pop %v1504
          %v1507 = vmul.bf16 %v1458, 1069105081
          %v1508 = vpow.bf16.pop %v1507
          %v1510 = vmul.bf16 %v1459, 1069105081
          %v1511 = vpow.bf16.pop %v1510
          %v1513 = vmul.bf16 %v1460, 1069105081
          %v1514 = vpow.bf16.pop %v1513
          %v1516 = vmul.bf16 %v1461, 1069105081
          %v1517 = vpow.bf16.pop %v1516
          %v1519 = vmul.bf16 %v1462, 1069105081
          %v1520 = vpow.bf16.pop %v1519
          %v1522 = vmul.bf16 %v1463, 1069105081
          %v1523 = vpow.bf16.pop %v1522
          %v1525 = vmul.bf16 %v1464, 1069105081
          %v1526 = vpow.bf16.pop %v1525
          %v1528 = vmul.bf16 %v1465, 1069105081
          %v1529 = vpow.bf16.pop %v1528
          %v1531 = vmul.bf16 %v1466, 1069105081
          %v1532 = vpow.bf16.pop %v1531
          %v1534 = vmul.bf16 %v1467, 1069105081
          %v1535 = vpow.bf16.pop %v1534
          %v1537 = vmul.bf16 %v1468, 1069105081
          %v1538 = vpow.bf16.pop %v1537
          %v1540 = vmul.bf16 %v1469, 1069105081
          %v1541 = vpow.bf16.pop %v1540
          %v1543 = vmul.bf16 %v1470, 1069105081
          %v1544 = vpow.bf16.pop %v1543
          %v1546 = vmul.bf16 %v1471, 1069105081
          %v1547 = vpow.bf16.pop %v1546
          %v1549 = vmul.bf16 %v1472, 1069105081
          %v1550 = vpow.bf16.pop %v1549
          %v1552 = vmul.bf16 %v1473, 1069105081
          %v1553 = vpow.bf16.pop %v1552
          %v1555 = vmul.bf16 %v1474, 1069105081
          %v1556 = vpow.bf16.pop %v1555
          %v1558 = vmul.bf16 %v1475, 1069105081
          %v1559 = vpow.bf16.pop %v1558
          %v1561 = vmul.bf16 %v1476, 1069105081
          %v1562 = vpow.bf16.pop %v1561
          %v1564 = vmul.bf16 %v1477, 1069105081
          %v1565 = vpow.bf16.pop %v1564
          %v1567 = vmul.bf16 %v1478, 1069105081
          %v1568 = vpow.bf16.pop %v1567
          %v1570 = vmul.bf16 %v1479, 1069105081
          %v1571 = vpow.bf16.pop %v1570
          %v1573 = vmul.bf16 %v1480, 1069105081
          %v1574 = vpow.bf16.pop %v1573
          %v1576 = vmul.bf16 %v1481, 1069105081
          %v1577 = vpow.bf16.pop %v1576
          %v1578 = vld [vmem:[#allocation2] sm:$0xff]
          %v1579 = vld [vmem:[#allocation2 + $0x8] sm:$0xff]
          %v1580 = vld [vmem:[%s363] sm:$0xff]
          %v1582 = vunpack.c.l.b16 %v1580
          %v1583 = vunpack.c.h.b16 %v1580
          %v1584 = vpack.c.b16 %v1582, %v1582
          %v1585 = vpack.c.b16 %v1583, %v1583
          %1588 = vmatprep.subr.bf16.mxu0 %v1529
          %1589 = vmatpush1.bf16.msra.mxu0 %v1526
          %1590 = vmatprep.subr.bf16.mxu0 %v1523
          %1591 = vmatpush1.bf16.msra.mxu0 %v1520
          %1592 = vmatprep.subr.bf16.mxu0 %v1517
          %1593 = vmatpush1.bf16.msra.mxu0 %v1514
          %1594 = vmatprep.subr.bf16.mxu0 %v1511
          %1595 = vmatpush1.bf16.msra.mxu0 %v1508
          %1596 = vmatprep.subr.bf16.mxu0 %v1505
          %1597 = vmatpush1.bf16.msra.mxu0 %v1502
          %1598 = vmatprep.subr.bf16.mxu0 %v1499
          %1599 = vmatpush1.bf16.msra.mxu0 %v1496
          %1600 = vmatprep.subr.bf16.mxu0 %v1493
          %1601 = vmatpush1.bf16.msra.mxu0 %v1490
          %1602 = vmatprep.subr.bf16.mxu0 %v1487
          %1603 = vmatpush1.bf16.msra.mxu0 %v1484
          %1604 = vmatprep.subr.bf16.mxu0 %v1577
          %1605 = vmatpush2.bf16.msra.mxu0 %v1574
          %1606 = vmatprep.subr.bf16.mxu0 %v1571
          %1607 = vmatpush2.bf16.msra.mxu0 %v1568
          %1608 = vmatprep.subr.bf16.mxu0 %v1565
          %1609 = vmatpush2.bf16.msra.mxu0 %v1562
          %1610 = vmatprep.subr.bf16.mxu0 %v1559
          %1611 = vmatpush2.bf16.msra.mxu0 %v1556
          %1612 = vmatprep.subr.bf16.mxu0 %v1553
          %1613 = vmatpush2.bf16.msra.mxu0 %v1550
          %1614 = vmatprep.subr.bf16.mxu0 %v1547
          %1615 = vmatpush2.bf16.msra.mxu0 %v1544
          %1616 = vmatprep.subr.bf16.mxu0 %v1541
          %1617 = vmatpush2.bf16.msra.mxu0 %v1538
          %1618 = vmatprep.subr.bf16.mxu0 %v1535
          %1619 = vmatpush2.bf16.msra.mxu0 %v1532
          %1620 = vmatprep.mubr.bf16.mxu0 %v1585
          %1621 = vmatmul.mubr.bf16.gmra.mxu0 %v1584
          %v1622 = vpop.f32.mrf.mxu0
          %v1623 = vadd.f32 0.0, %v1622
          %v1624 = vpop.f32.mrf.mxu0
          %v1625 = vadd.f32 0.0, %v1624
          %v1626 = vpop.f32.mrf.mxu0
          %v1627 = vpop.f32.mrf.mxu0
          %1628 = vdwg.mxu0
          %v1629 = vadd.f32 %v1578, %v1623
          %v1630 = vadd.f32 %v1579, %v1625
          %1631 = vst [vmem:[#allocation2] sm:$0xff] %v1629
          %1632 = vst [vmem:[#allocation2 + $0x8] sm:$0xff] %v1630
        $region44: #{tpu_custom_call.1} parent=35 // pred_fallthru
          _
        // Predicated region
        $region45: #{tpu_custom_call.1} parent=35 // pred_check
          %p1633 = pneg %p386
        $region46: #{tpu_custom_call.1} parent=35 // pred_check_branch
          %1635 = sbr.rel (%p1633) target = $region48
        $region47: #{tpu_custom_call.1} parent=35 // pred_region
          %v1636 = vld [vmem:[#allocation2] sm:$0xff]
          %v1637 = vld [vmem:[#allocation2 + $0x8] sm:$0xff]
          %v1638 = vsub.f32 0.0, %v1636
          %v1639 = vsub.f32 0.0, %v1637
          %v1640 = vmul.f32 %v1638, 1.442695
          %v1641 = vpow.pop %v1640
          %v1642 = vmul.f32 %v1639, 1.442695
          %v1643 = vpow.pop %v1642
          %v1644 = vsub.f32 1.0, %v1641
          %v1645 = vsub.f32 1.0, %v1643
          %v1646 = vmax.f32 %v1636, 1e-08
          %v1647 = vmax.f32 %v1637, 1e-08
          %v1648 = vrcp.pop %v1646
          %v1649 = vrcp.pop %v1647
          %v1650 = vmul.f32 %v1648, %v1644
          %v1651 = vmul.f32 %v1649, %v1645
          %v1652 = vlaneseq
          %v1653 = vshrl.u32 %v1652, 7
          %v1654 = vsub.s32 4, %v1653
          %v1655 = vrot.slane %v1650, %v1654
          %v1656 = vlaneseq
          %v1657 = vshrl.u32 %v1656, 7
          %v1658 = vsub.s32 4, %v1657
          %v1659 = vrot.slane %v1651, %v1658
          %v1660 = vmul.f32 %v1636, %v1655
          %v1661 = vmul.f32 %v1637, %v1659
          %v1664 = vrot.slane %v1648, 1
          %v1665 = vrot.slane %v1649, 1
          %v1668 = vmul.f32 %v1636, %v1664
          %v1669 = vmul.f32 %v1637, %v1665
          %v1670 = vld [vmem:[%s383] sm:$0x77]
          %v1671 = vsub.f32 1.0, %v1644
          %v1672 = vsub.f32 1.0, %v1645
          %v1673 = vlaneseq
          %v1674 = vshrl.u32 %v1673, 7
          %v1675 = vsub.s32 4, %v1674
          %v1676 = vrot.slane %v1671, %v1675
          %v1677 = vlaneseq
          %v1678 = vshrl.u32 %v1677, 7
          %v1679 = vsub.s32 4, %v1678
          %v1680 = vrot.slane %v1672, %v1679
          %v1682 = vcombine.high %v1670, %v1670
          %v1684 = vmul.f32 %v1676, %v1670
          %v1685 = vmul.f32 %v1680, %v1682
          %v1686 = vadd.f32 %v1660, %v1684
          %v1687 = vadd.f32 %v1661, %v1685
          %v1690 = vrot.slane %v1660, 5
          %v1691 = vrot.slane %v1661, 5
          %v1696 = vrot.slane %v1668, 5
          %v1697 = vrot.slane %v1669, 5
          %v1702 = vrot.slane %v1644, 5
          %v1703 = vrot.slane %v1645, 5
          %vm1706 = vcmask 1042432
          %v1707 = vsel %vm1706, %v1686, %v1690
          %v1708 = vsel %vm1706, %v1687, %v1691
          %vm1709 = vcmask 1045504
          %v1710 = vsel %vm1709, %v1707, %v1696
          %v1711 = vsel %vm1709, %v1708, %v1697
          %vm1712 = vcmask 1046528
          %v1713 = vsel %vm1712, %v1710, %v1702
          %v1714 = vsel %vm1712, %v1711, %v1703
          %1715 = vst [vmem:[%s336] sm:$0xff] %v1713
          %1716 = vst [vmem:[%s336 + $0x8] sm:$0xff] %v1714
        $region48: #{tpu_custom_call.1} parent=35 // pred_fallthru
          _
        %s1717 = sand.u32 %s179, 1
        %s1718 = scalar_lea.sflag [#allocation6], %s1717
        %s1719 = sand.u32 %s179, 1
        %s1720 = smul.addr %s1719, 16
        %s1721 = scalar_lea.vmem [#allocation5], %s1720
        // Predicated region
        $region49: #{tpu_custom_call.1} parent=35 // pred_check
          %p1722 = pneg %p189
        $region50: #{tpu_custom_call.1} parent=35 // pred_check_branch
          %1724 = sbr.rel (%p1722) target = $region52
        $region51: #{tpu_custom_call.1} parent=35 // pred_region
          %s1725 = smul.u32 2, %s33
          %s1727 = ssub.s32 256, 256
          %1728 = vsyncadd %s1718, %s1727
          %s1729 = smul.addr %s32, 2
          %s1730 = sadd.s32 %s1725, %s1729
          %s1731 = smul.addr %s31, 4
          %s1732 = sadd.s32 %s1730, %s1731
          %s1733 = smul.addr %s1732, 128
          %s1734 = scalar_lea.hbm %s5, %s1733
          %s1736 = sshll.u32 %s1721, 4
          %s1737 = int_to_ptr.vmem [resolvable:$true] %s1736
          %1739 = dma.vmem_to_hbm [thread:$0]  %s1737, 256, %s1734, %s1718
        $region52: #{tpu_custom_call.1} parent=35 // pred_fallthru
          _
      $region36: #{tpu_custom_call.1} parent=5 // pred_fallthru
        _
      %p1740 = scmp.le.s32.totalorder 2, %s20
      // Predicated region
      $region53: #{tpu_custom_call.1} parent=5 // pred_check
        %p1741 = pneg %p1740
      $region54: #{tpu_custom_call.1} parent=5 // pred_check_branch
        %1743 = sbr.rel (%p1741) target = $region56
      $region55: #{tpu_custom_call.1} parent=5 // pred_region
        %s1744 = ssub.s32 %s20, 2
        // Predicated region
        $region57: #{tpu_custom_call.1} parent=55 // pred_check
          %p1745 = pneg %p195
        $region58: #{tpu_custom_call.1} parent=55 // pred_check_branch
          %1747 = sbr.rel (%p1745) target = $region60
        $region59: #{tpu_custom_call.1} parent=55 // pred_region
          %s1748 = sand.u32 %s180, 1
          %s1749 = scalar_lea.sflag [#allocation6], %s1748
          %s1750 = sand.u32 %s180, 1
          %s1751 = smul.addr %s1750, 16
          %s1752 = scalar_lea.vmem [#allocation5], %s1751
          %1753 = dma.done %s1749, 256
        $region60: #{tpu_custom_call.1} parent=55 // pred_fallthru
          _
      $region56: #{tpu_custom_call.1} parent=5 // pred_fallthru
        _
    $region6: #{tpu_custom_call.1} parent=1 // loop_footer
      %s24 = sadd.s32 1, %s20
    $region7: #{tpu_custom_call.1} parent=1 // loop_footer_branch
      %19 = sbr.rel target = $region3
    $region8: #{tpu_custom_call.1} parent=1 // loop_exit
      _
    %1754 = vsyncpa [#allocation6], 1
    %s1755 = scalar_lea.sflag [#allocation6], 1
    %1756 = vsyncpa %s1755, 1

</llo_original>
